<compile_context>
chip_gen: v5e
topology: v5e:2x2
jax: 0.10.0
libtpu: 0.0.40
codegen_flags: <defaults>
</compile_context>

<pallas_src>
import math

import jax
import jax.numpy as jnp
from jax.experimental import pallas as pl
from jax.experimental.pallas import tpu as pltpu


# ----------------------------- fused Pallas kernel -----------------------------

def build_fused_tcn_kernel(T, BN, Cout, layer_kernels, has_upsample):
    """Builds kernel(*refs) with refs =
       [x2d, (w_up, b_up)?, (w, b, bn_scale, bn_shift) per layer ..., out]."""

    def kernel(*refs):
        x_ref = refs[0]
        o_ref = refs[-1]
        base = 1
        if has_upsample:
            wu_ref, bu_ref = refs[1], refs[2]
            base = 3

        h = x_ref[...]                                       # (T*BN, Cin), f32, rows (t,b,n)

        # Residual source for layer 0 = (optionally upsampled) input.
        if has_upsample:
            x_res = (jnp.dot(h, wu_ref[...], preferred_element_type=jnp.float32)
                     + bu_ref[...])                          # (T*BN, Cout)
        else:
            x_res = h

        T_cur = T
        for li, k in enumerate(layer_kernels):
            w = refs[base + 4 * li][...]                     # (k, Cin_l, 3*Cout)
            b = refs[base + 4 * li + 1][...]                 # (1, 3*Cout) fused bias
            scale = refs[base + 4 * li + 2][...]             # (1, Cout)  BN scale
            shift = refs[base + 4 * li + 3][...]             # (1, Cout)  BN shift

            T_out = T_cur - k + 1
            M = T_out * BN

            # conv1|conv2|conv3 fused: one (Cin_l, 3*Cout) dot per temporal tap.
            acc = jnp.dot(h[0:M], w[0], preferred_element_type=jnp.float32)
            for dt in range(1, k):
                acc = acc + jnp.dot(h[dt * BN:dt * BN + M], w[dt],
                                    preferred_element_type=jnp.float32)
            acc = acc + b

            y1 = acc[:, 0 * Cout:1 * Cout]
            y2 = acc[:, 1 * Cout:2 * Cout]
            y3 = acc[:, 2 * Cout:3 * Cout]
            sig = pl.reciprocal(1.0 + jnp.exp(-y2), approx=True)   # sigmoid on EUP
            out = jnp.maximum(y1 + sig + y3, 0.0)                  # relu(conv1+sig(conv2)+conv3)
            out = out * scale + shift                              # BatchNorm2d (eval, folded)
            # TODO(synk): F.dropout is identity in eval mode; training-mode RNG
            # dropout (and training-mode BN batch statistics) not implemented.

            # Residual add from TCN.forward (inputs[:,2:] / out[:,2:] / out[:,-1:]).
            res_base = x_res if li == 0 else h
            res = res_base[(T_cur - T_out) * BN:, :]
            h = out + res                                          # (M, Cout)
            T_cur = T_out

        o_ref[...] = h                                             # (T_final*BN, Cout)

    return kernel


# --------------------------------- forward ---------------------------------

def tcn_forward(params, x):
    """x: (B, n_history, N, in_features) -> (B, 1, N, mid_features)."""
    B, T, N, Cin = x.shape
    layers = params["layers"]
    Cout = layers[0]["bn_scale"].shape[-1]
    BN = B * N
    layer_kernels = tuple(lp["kernel"] for lp in layers)
    has_upsample = params["upsample"] is not None

    # Rows ordered (t, b, n): temporal conv taps become contiguous,
    # sublane-aligned row slices inside the kernel.
    x2d = jnp.transpose(x, (1, 0, 2, 3)).reshape(T * BN, Cin)

    flat = []
    if has_upsample:
        flat += [params["upsample"]["w"], params["upsample"]["b"]]
    for lp in layers:
        flat += [lp["w"], lp["b"], lp["bn_scale"], lp["bn_shift"]]

    T_final = T
    for k in layer_kernels:
        T_final = T_final - k + 1

    kernel = build_fused_tcn_kernel(T, BN, Cout, layer_kernels, has_upsample)
    vmem = pl.BlockSpec(memory_space=pltpu.MemorySpace.VMEM)
    out2d = pl.pallas_call(
        kernel,
        out_shape=jax.ShapeDtypeStruct((T_final * BN, Cout), jnp.float32),
        in_specs=[vmem] * (1 + len(flat)),
        out_specs=vmem,
    )(x2d, *flat)

    # rows are (t, b, n) with t = 0..T_final-1  ->  (B, T_final, N, Cout)
    return jnp.transpose(out2d.reshape(T_final, B, N, Cout), (1, 0, 2, 3))


# ----------------------------- parameter setup ------------------------------

def _init_conv_tap(key, cin, cout, k):
    """PyTorch Conv2d(cin, cout, kernel=(1,k)) params in (k, cin, cout) tap layout."""
    kw, kb = jax.random.split(key)
    bound = 1.0 / math.sqrt(cin * k)
    w = jax.random.uniform(kw, (cout, cin, 1, k), jnp.float32, -bound, bound)
    b = jax.random.uniform(kb, (cout,), jnp.float32, -bound, bound)
    return jnp.transpose(w[:, :, 0, :], (2, 1, 0)), b       # (k, cin, cout), (cout,)


def init_tcn_layer(key, cin, cout, kernel=3):
    k1, k2, k3 = jax.random.split(key, 3)
    w1, b1 = _init_conv_tap(k1, cin, cout, kernel)
    w2, b2 = _init_conv_tap(k2, cin, cout, kernel)
    w3, b3 = _init_conv_tap(k3, cin, cout, kernel)
    # Fuse conv1|conv2|conv3 along output channels -> one dot per temporal tap.
    w = jnp.concatenate([w1, w2, w3], axis=-1)               # (k, cin, 3*cout)
    b = jnp.concatenate([b1, b2, b3]).reshape(1, 3 * cout)   # (1, 3*cout)
    # BatchNorm2d eval mode with fresh running stats (gamma=1, beta=0,
    # mean=0, var=1, eps=1e-5) folded into scale/shift.
    eps = 1e-5
    gamma = jnp.ones((1, cout), jnp.float32)
    beta = jnp.zeros((1, cout), jnp.float32)
    mean = jnp.zeros((1, cout), jnp.float32)
    var = jnp.ones((1, cout), jnp.float32)
    scale = gamma / jnp.sqrt(var + eps)
    shift = beta - mean * scale
    return dict(kernel=kernel, w=w, b=b, bn_scale=scale, bn_shift=shift)


def init_linear(key, cin, cout):
    kw, kb = jax.random.split(key)
    bound = 1.0 / math.sqrt(cin)
    w = jax.random.uniform(kw, (cout, cin), jnp.float32, -bound, bound)
    b = jax.random.uniform(kb, (cout,), jnp.float32, -bound, bound)
    return dict(w=w.T, b=b.reshape(1, cout))


def init_tcn(key, n_history, in_features, mid_features):
    assert n_history >= 3
    is_even = (n_history % 2 == 0)
    n_layers = n_history // 2 - 1 if is_even else n_history // 2
    keys = jax.random.split(key, n_layers + 2)
    layers = [init_tcn_layer(keys[0], in_features, mid_features, 3)]
    for i in range(1, n_layers):
        layers.append(init_tcn_layer(keys[i], mid_features, mid_features, 3))
    if is_even:
        layers.append(init_tcn_layer(keys[n_layers], mid_features, mid_features, 2))
    upsample = (None if in_features == mid_features
                else init_linear(keys[-1], in_features, mid_features))
    return dict(layers=layers, upsample=upsample)


# ------------------------------------ main -----------------------------------

if __name__ == "__main__":
    key = jax.random.PRNGKey(0)
    kp, kx = jax.random.split(key)

    B, n_history, num_node, in_features, mid_features = 2, 8, 16, 4, 8
    params = init_tcn(kp, n_history, in_features, mid_features)
    x = jax.random.normal(kx, (B, n_history, num_node, in_features), jnp.float32)

    out = tcn_forward(params, x)
    jax.block_until_ready(out)
    assert out.shape == (B, 1, num_node, mid_features), out.shape
    print("KERNEL_OK")
</pallas_src>

<mosaic_0001>
module attributes {stable_mosaic.version = 11 : i64} {
  func.func @kernel(%arg0: memref<256x4xf32, #tpu.memory_space<vmem>>, %arg1: memref<4x8xf32, #tpu.memory_space<vmem>>, %arg2: memref<1x8xf32, #tpu.memory_space<vmem>>, %arg3: memref<3x4x24xf32, #tpu.memory_space<vmem>>, %arg4: memref<1x24xf32, #tpu.memory_space<vmem>>, %arg5: memref<1x8xf32, #tpu.memory_space<vmem>>, %arg6: memref<1x8xf32, #tpu.memory_space<vmem>>, %arg7: memref<3x8x24xf32, #tpu.memory_space<vmem>>, %arg8: memref<1x24xf32, #tpu.memory_space<vmem>>, %arg9: memref<1x8xf32, #tpu.memory_space<vmem>>, %arg10: memref<1x8xf32, #tpu.memory_space<vmem>>, %arg11: memref<3x8x24xf32, #tpu.memory_space<vmem>>, %arg12: memref<1x24xf32, #tpu.memory_space<vmem>>, %arg13: memref<1x8xf32, #tpu.memory_space<vmem>>, %arg14: memref<1x8xf32, #tpu.memory_space<vmem>>, %arg15: memref<2x8x24xf32, #tpu.memory_space<vmem>>, %arg16: memref<1x24xf32, #tpu.memory_space<vmem>>, %arg17: memref<1x8xf32, #tpu.memory_space<vmem>>, %arg18: memref<1x8xf32, #tpu.memory_space<vmem>>, %arg19: memref<32x8xf32, #tpu.memory_space<vmem>>) attributes {dimension_semantics = [], scalar_prefetch = 0 : i64, scratch_operands = 0 : i64, tpu.core_type = #tpu.core_type<tc>} {
    %c0 = arith.constant 0 : index
    %c0_0 = arith.constant 0 : index
    %0 = vector.load %arg0[%c0, %c0_0] : memref<256x4xf32, #tpu.memory_space<vmem>>, vector<256x4xf32>
    %c0_1 = arith.constant 0 : index
    %c0_2 = arith.constant 0 : index
    %1 = vector.load %arg1[%c0_1, %c0_2] : memref<4x8xf32, #tpu.memory_space<vmem>>, vector<4x8xf32>
    %cst = arith.constant dense<0.000000e+00> : vector<256x8xf32>
    %2 = tpu.matmul %0, %1, %cst {dimension_numbers = #tpu.dot_dimension_numbers<[1], [0], [0], [1], [0, 0, 1, 1], [], []>} : vector<256x4xf32>, vector<4x8xf32>, vector<256x8xf32> -> vector<256x8xf32>
    %c0_3 = arith.constant 0 : index
    %c0_4 = arith.constant 0 : index
    %3 = vector.load %arg2[%c0_3, %c0_4] : memref<1x8xf32, #tpu.memory_space<vmem>>, vector<1x8xf32>
    %4 = vector.broadcast %3 : vector<1x8xf32> to vector<256x8xf32>
    %5 = arith.addf %2, %4 : vector<256x8xf32>
    %c0_5 = arith.constant 0 : index
    %c0_6 = arith.constant 0 : index
    %c0_7 = arith.constant 0 : index
    %6 = vector.load %arg3[%c0_5, %c0_6, %c0_7] : memref<3x4x24xf32, #tpu.memory_space<vmem>>, vector<3x4x24xf32>
    %c0_8 = arith.constant 0 : index
    %c0_9 = arith.constant 0 : index
    %7 = vector.load %arg4[%c0_8, %c0_9] : memref<1x24xf32, #tpu.memory_space<vmem>>, vector<1x24xf32>
    %c0_10 = arith.constant 0 : index
    %c0_11 = arith.constant 0 : index
    %8 = vector.load %arg5[%c0_10, %c0_11] : memref<1x8xf32, #tpu.memory_space<vmem>>, vector<1x8xf32>
    %c0_12 = arith.constant 0 : index
    %c0_13 = arith.constant 0 : index
    %9 = vector.load %arg6[%c0_12, %c0_13] : memref<1x8xf32, #tpu.memory_space<vmem>>, vector<1x8xf32>
    %10 = vector.extract_strided_slice %0 {offsets = [0, 0], sizes = [192, 4], strides = [1, 1]} : vector<256x4xf32> to vector<192x4xf32>
    %11 = vector.extract_strided_slice %6 {offsets = [0, 0, 0], sizes = [1, 4, 24], strides = [1, 1, 1]} : vector<3x4x24xf32> to vector<1x4x24xf32>
    %12 = vector.shape_cast %11 : vector<1x4x24xf32> to vector<4x24xf32>
    %cst_14 = arith.constant dense<0.000000e+00> : vector<192x24xf32>
    %13 = tpu.matmul %10, %12, %cst_14 {dimension_numbers = #tpu.dot_dimension_numbers<[1], [0], [0], [1], [0, 0, 1, 1], [], []>} : vector<192x4xf32>, vector<4x24xf32>, vector<192x24xf32> -> vector<192x24xf32>
    %14 = vector.extract_strided_slice %0 {offsets = [32, 0], sizes = [192, 4], strides = [1, 1]} : vector<256x4xf32> to vector<192x4xf32>
    %15 = vector.extract_strided_slice %6 {offsets = [1, 0, 0], sizes = [1, 4, 24], strides = [1, 1, 1]} : vector<3x4x24xf32> to vector<1x4x24xf32>
    %16 = vector.shape_cast %15 : vector<1x4x24xf32> to vector<4x24xf32>
    %cst_15 = arith.constant dense<0.000000e+00> : vector<192x24xf32>
    %17 = tpu.matmul %14, %16, %cst_15 {dimension_numbers = #tpu.dot_dimension_numbers<[1], [0], [0], [1], [0, 0, 1, 1], [], []>} : vector<192x4xf32>, vector<4x24xf32>, vector<192x24xf32> -> vector<192x24xf32>
    %18 = arith.addf %13, %17 : vector<192x24xf32>
    %19 = vector.extract_strided_slice %0 {offsets = [64, 0], sizes = [192, 4], strides = [1, 1]} : vector<256x4xf32> to vector<192x4xf32>
    %20 = vector.extract_strided_slice %6 {offsets = [2, 0, 0], sizes = [1, 4, 24], strides = [1, 1, 1]} : vector<3x4x24xf32> to vector<1x4x24xf32>
    %21 = vector.shape_cast %20 : vector<1x4x24xf32> to vector<4x24xf32>
    %cst_16 = arith.constant dense<0.000000e+00> : vector<192x24xf32>
    %22 = tpu.matmul %19, %21, %cst_16 {dimension_numbers = #tpu.dot_dimension_numbers<[1], [0], [0], [1], [0, 0, 1, 1], [], []>} : vector<192x4xf32>, vector<4x24xf32>, vector<192x24xf32> -> vector<192x24xf32>
    %23 = arith.addf %18, %22 : vector<192x24xf32>
    %24 = vector.broadcast %7 : vector<1x24xf32> to vector<192x24xf32>
    %25 = arith.addf %23, %24 : vector<192x24xf32>
    %26 = vector.extract_strided_slice %25 {offsets = [0, 0], sizes = [192, 8], strides = [1, 1]} : vector<192x24xf32> to vector<192x8xf32>
    %27 = vector.extract_strided_slice %25 {offsets = [0, 8], sizes = [192, 8], strides = [1, 1]} : vector<192x24xf32> to vector<192x8xf32>
    %28 = vector.extract_strided_slice %25 {offsets = [0, 16], sizes = [192, 8], strides = [1, 1]} : vector<192x24xf32> to vector<192x8xf32>
    %cst_17 = arith.constant 0.000000e+00 : f32
    %29 = vector.broadcast %cst_17 : f32 to vector<192x8xf32>
    %30 = arith.subf %29, %27 : vector<192x8xf32>
    %31 = math.exp %30 : vector<192x8xf32>
    %cst_18 = arith.constant 1.000000e+00 : f32
    %32 = vector.broadcast %cst_18 : f32 to vector<192x8xf32>
    %33 = arith.addf %32, %31 : vector<192x8xf32>
    %34 = tpu.reciprocal %33 {approx = true} : vector<192x8xf32> -> vector<192x8xf32>
    %35 = arith.addf %26, %34 : vector<192x8xf32>
    %36 = arith.addf %35, %28 : vector<192x8xf32>
    %cst_19 = arith.constant 0.000000e+00 : f32
    %37 = vector.broadcast %cst_19 : f32 to vector<192x8xf32>
    %38 = arith.maximumf %36, %37 : vector<192x8xf32>
    %39 = vector.broadcast %8 : vector<1x8xf32> to vector<192x8xf32>
    %40 = arith.mulf %38, %39 : vector<192x8xf32>
    %41 = vector.broadcast %9 : vector<1x8xf32> to vector<192x8xf32>
    %42 = arith.addf %40, %41 : vector<192x8xf32>
    %43 = vector.extract_strided_slice %5 {offsets = [64, 0], sizes = [192, 8], strides = [1, 1]} : vector<256x8xf32> to vector<192x8xf32>
    %44 = arith.addf %42, %43 : vector<192x8xf32>
    %c0_20 = arith.constant 0 : index
    %c0_21 = arith.constant 0 : index
    %c0_22 = arith.constant 0 : index
    %45 = vector.load %arg7[%c0_20, %c0_21, %c0_22] : memref<3x8x24xf32, #tpu.memory_space<vmem>>, vector<3x8x24xf32>
    %c0_23 = arith.constant 0 : index
    %c0_24 = arith.constant 0 : index
    %46 = vector.load %arg8[%c0_23, %c0_24] : memref<1x24xf32, #tpu.memory_space<vmem>>, vector<1x24xf32>
    %c0_25 = arith.constant 0 : index
    %c0_26 = arith.constant 0 : index
    %47 = vector.load %arg9[%c0_25, %c0_26] : memref<1x8xf32, #tpu.memory_space<vmem>>, vector<1x8xf32>
    %c0_27 = arith.constant 0 : index
    %c0_28 = arith.constant 0 : index
    %48 = vector.load %arg10[%c0_27, %c0_28] : memref<1x8xf32, #tpu.memory_space<vmem>>, vector<1x8xf32>
    %49 = vector.extract_strided_slice %44 {offsets = [0, 0], sizes = [128, 8], strides = [1, 1]} : vector<192x8xf32> to vector<128x8xf32>
    %50 = vector.extract_strided_slice %45 {offsets = [0, 0, 0], sizes = [1, 8, 24], strides = [1, 1, 1]} : vector<3x8x24xf32> to vector<1x8x24xf32>
    %51 = vector.shape_cast %50 : vector<1x8x24xf32> to vector<8x24xf32>
    %cst_29 = arith.constant dense<0.000000e+00> : vector<128x24xf32>
    %52 = tpu.matmul %49, %51, %cst_29 {dimension_numbers = #tpu.dot_dimension_numbers<[1], [0], [0], [1], [0, 0, 1, 1], [], []>} : vector<128x8xf32>, vector<8x24xf32>, vector<128x24xf32> -> vector<128x24xf32>
    %53 = vector.extract_strided_slice %44 {offsets = [32, 0], sizes = [128, 8], strides = [1, 1]} : vector<192x8xf32> to vector<128x8xf32>
    %54 = vector.extract_strided_slice %45 {offsets = [1, 0, 0], sizes = [1, 8, 24], strides = [1, 1, 1]} : vector<3x8x24xf32> to vector<1x8x24xf32>
    %55 = vector.shape_cast %54 : vector<1x8x24xf32> to vector<8x24xf32>
    %cst_30 = arith.constant dense<0.000000e+00> : vector<128x24xf32>
    %56 = tpu.matmul %53, %55, %cst_30 {dimension_numbers = #tpu.dot_dimension_numbers<[1], [0], [0], [1], [0, 0, 1, 1], [], []>} : vector<128x8xf32>, vector<8x24xf32>, vector<128x24xf32> -> vector<128x24xf32>
    %57 = arith.addf %52, %56 : vector<128x24xf32>
    %58 = vector.extract_strided_slice %44 {offsets = [64, 0], sizes = [128, 8], strides = [1, 1]} : vector<192x8xf32> to vector<128x8xf32>
    %59 = vector.extract_strided_slice %45 {offsets = [2, 0, 0], sizes = [1, 8, 24], strides = [1, 1, 1]} : vector<3x8x24xf32> to vector<1x8x24xf32>
    %60 = vector.shape_cast %59 : vector<1x8x24xf32> to vector<8x24xf32>
    %cst_31 = arith.constant dense<0.000000e+00> : vector<128x24xf32>
    %61 = tpu.matmul %58, %60, %cst_31 {dimension_numbers = #tpu.dot_dimension_numbers<[1], [0], [0], [1], [0, 0, 1, 1], [], []>} : vector<128x8xf32>, vector<8x24xf32>, vector<128x24xf32> -> vector<128x24xf32>
    %62 = arith.addf %57, %61 : vector<128x24xf32>
    %63 = vector.broadcast %46 : vector<1x24xf32> to vector<128x24xf32>
    %64 = arith.addf %62, %63 : vector<128x24xf32>
    %65 = vector.extract_strided_slice %64 {offsets = [0, 0], sizes = [128, 8], strides = [1, 1]} : vector<128x24xf32> to vector<128x8xf32>
    %66 = vector.extract_strided_slice %64 {offsets = [0, 8], sizes = [128, 8], strides = [1, 1]} : vector<128x24xf32> to vector<128x8xf32>
    %67 = vector.extract_strided_slice %64 {offsets = [0, 16], sizes = [128, 8], strides = [1, 1]} : vector<128x24xf32> to vector<128x8xf32>
    %cst_32 = arith.constant 0.000000e+00 : f32
    %68 = vector.broadcast %cst_32 : f32 to vector<128x8xf32>
    %69 = arith.subf %68, %66 : vector<128x8xf32>
    %70 = math.exp %69 : vector<128x8xf32>
    %cst_33 = arith.constant 1.000000e+00 : f32
    %71 = vector.broadcast %cst_33 : f32 to vector<128x8xf32>
    %72 = arith.addf %71, %70 : vector<128x8xf32>
    %73 = tpu.reciprocal %72 {approx = true} : vector<128x8xf32> -> vector<128x8xf32>
    %74 = arith.addf %65, %73 : vector<128x8xf32>
    %75 = arith.addf %74, %67 : vector<128x8xf32>
    %cst_34 = arith.constant 0.000000e+00 : f32
    %76 = vector.broadcast %cst_34 : f32 to vector<128x8xf32>
    %77 = arith.maximumf %75, %76 : vector<128x8xf32>
    %78 = vector.broadcast %47 : vector<1x8xf32> to vector<128x8xf32>
    %79 = arith.mulf %77, %78 : vector<128x8xf32>
    %80 = vector.broadcast %48 : vector<1x8xf32> to vector<128x8xf32>
    %81 = arith.addf %79, %80 : vector<128x8xf32>
    %82 = vector.extract_strided_slice %44 {offsets = [64, 0], sizes = [128, 8], strides = [1, 1]} : vector<192x8xf32> to vector<128x8xf32>
    %83 = arith.addf %81, %82 : vector<128x8xf32>
    %c0_35 = arith.constant 0 : index
    %c0_36 = arith.constant 0 : index
    %c0_37 = arith.constant 0 : index
    %84 = vector.load %arg11[%c0_35, %c0_36, %c0_37] : memref<3x8x24xf32, #tpu.memory_space<vmem>>, vector<3x8x24xf32>
    %c0_38 = arith.constant 0 : index
    %c0_39 = arith.constant 0 : index
    %85 = vector.load %arg12[%c0_38, %c0_39] : memref<1x24xf32, #tpu.memory_space<vmem>>, vector<1x24xf32>
    %c0_40 = arith.constant 0 : index
    %c0_41 = arith.constant 0 : index
    %86 = vector.load %arg13[%c0_40, %c0_41] : memref<1x8xf32, #tpu.memory_space<vmem>>, vector<1x8xf32>
    %c0_42 = arith.constant 0 : index
    %c0_43 = arith.constant 0 : index
    %87 = vector.load %arg14[%c0_42, %c0_43] : memref<1x8xf32, #tpu.memory_space<vmem>>, vector<1x8xf32>
    %88 = vector.extract_strided_slice %83 {offsets = [0, 0], sizes = [64, 8], strides = [1, 1]} : vector<128x8xf32> to vector<64x8xf32>
    %89 = vector.extract_strided_slice %84 {offsets = [0, 0, 0], sizes = [1, 8, 24], strides = [1, 1, 1]} : vector<3x8x24xf32> to vector<1x8x24xf32>
    %90 = vector.shape_cast %89 : vector<1x8x24xf32> to vector<8x24xf32>
    %cst_44 = arith.constant dense<0.000000e+00> : vector<64x24xf32>
    %91 = tpu.matmul %88, %90, %cst_44 {dimension_numbers = #tpu.dot_dimension_numbers<[1], [0], [0], [1], [0, 0, 1, 1], [], []>} : vector<64x8xf32>, vector<8x24xf32>, vector<64x24xf32> -> vector<64x24xf32>
    %92 = vector.extract_strided_slice %83 {offsets = [32, 0], sizes = [64, 8], strides = [1, 1]} : vector<128x8xf32> to vector<64x8xf32>
    %93 = vector.extract_strided_slice %84 {offsets = [1, 0, 0], sizes = [1, 8, 24], strides = [1, 1, 1]} : vector<3x8x24xf32> to vector<1x8x24xf32>
    %94 = vector.shape_cast %93 : vector<1x8x24xf32> to vector<8x24xf32>
    %cst_45 = arith.constant dense<0.000000e+00> : vector<64x24xf32>
    %95 = tpu.matmul %92, %94, %cst_45 {dimension_numbers = #tpu.dot_dimension_numbers<[1], [0], [0], [1], [0, 0, 1, 1], [], []>} : vector<64x8xf32>, vector<8x24xf32>, vector<64x24xf32> -> vector<64x24xf32>
    %96 = arith.addf %91, %95 : vector<64x24xf32>
    %97 = vector.extract_strided_slice %83 {offsets = [64, 0], sizes = [64, 8], strides = [1, 1]} : vector<128x8xf32> to vector<64x8xf32>
    %98 = vector.extract_strided_slice %84 {offsets = [2, 0, 0], sizes = [1, 8, 24], strides = [1, 1, 1]} : vector<3x8x24xf32> to vector<1x8x24xf32>
    %99 = vector.shape_cast %98 : vector<1x8x24xf32> to vector<8x24xf32>
    %cst_46 = arith.constant dense<0.000000e+00> : vector<64x24xf32>
    %100 = tpu.matmul %97, %99, %cst_46 {dimension_numbers = #tpu.dot_dimension_numbers<[1], [0], [0], [1], [0, 0, 1, 1], [], []>} : vector<64x8xf32>, vector<8x24xf32>, vector<64x24xf32> -> vector<64x24xf32>
    %101 = arith.addf %96, %100 : vector<64x24xf32>
    %102 = vector.broadcast %85 : vector<1x24xf32> to vector<64x24xf32>
    %103 = arith.addf %101, %102 : vector<64x24xf32>
    %104 = vector.extract_strided_slice %103 {offsets = [0, 0], sizes = [64, 8], strides = [1, 1]} : vector<64x24xf32> to vector<64x8xf32>
    %105 = vector.extract_strided_slice %103 {offsets = [0, 8], sizes = [64, 8], strides = [1, 1]} : vector<64x24xf32> to vector<64x8xf32>
    %106 = vector.extract_strided_slice %103 {offsets = [0, 16], sizes = [64, 8], strides = [1, 1]} : vector<64x24xf32> to vector<64x8xf32>
    %cst_47 = arith.constant 0.000000e+00 : f32
    %107 = vector.broadcast %cst_47 : f32 to vector<64x8xf32>
    %108 = arith.subf %107, %105 : vector<64x8xf32>
    %109 = math.exp %108 : vector<64x8xf32>
    %cst_48 = arith.constant 1.000000e+00 : f32
    %110 = vector.broadcast %cst_48 : f32 to vector<64x8xf32>
    %111 = arith.addf %110, %109 : vector<64x8xf32>
    %112 = tpu.reciprocal %111 {approx = true} : vector<64x8xf32> -> vector<64x8xf32>
    %113 = arith.addf %104, %112 : vector<64x8xf32>
    %114 = arith.addf %113, %106 : vector<64x8xf32>
    %cst_49 = arith.constant 0.000000e+00 : f32
    %115 = vector.broadcast %cst_49 : f32 to vector<64x8xf32>
    %116 = arith.maximumf %114, %115 : vector<64x8xf32>
    %117 = vector.broadcast %86 : vector<1x8xf32> to vector<64x8xf32>
    %118 = arith.mulf %116, %117 : vector<64x8xf32>
    %119 = vector.broadcast %87 : vector<1x8xf32> to vector<64x8xf32>
    %120 = arith.addf %118, %119 : vector<64x8xf32>
    %121 = vector.extract_strided_slice %83 {offsets = [64, 0], sizes = [64, 8], strides = [1, 1]} : vector<128x8xf32> to vector<64x8xf32>
    %122 = arith.addf %120, %121 : vector<64x8xf32>
    %c0_50 = arith.constant 0 : index
    %c0_51 = arith.constant 0 : index
    %c0_52 = arith.constant 0 : index
    %123 = vector.load %arg15[%c0_50, %c0_51, %c0_52] : memref<2x8x24xf32, #tpu.memory_space<vmem>>, vector<2x8x24xf32>
    %c0_53 = arith.constant 0 : index
    %c0_54 = arith.constant 0 : index
    %124 = vector.load %arg16[%c0_53, %c0_54] : memref<1x24xf32, #tpu.memory_space<vmem>>, vector<1x24xf32>
    %c0_55 = arith.constant 0 : index
    %c0_56 = arith.constant 0 : index
    %125 = vector.load %arg17[%c0_55, %c0_56] : memref<1x8xf32, #tpu.memory_space<vmem>>, vector<1x8xf32>
    %c0_57 = arith.constant 0 : index
    %c0_58 = arith.constant 0 : index
    %126 = vector.load %arg18[%c0_57, %c0_58] : memref<1x8xf32, #tpu.memory_space<vmem>>, vector<1x8xf32>
    %127 = vector.extract_strided_slice %122 {offsets = [0, 0], sizes = [32, 8], strides = [1, 1]} : vector<64x8xf32> to vector<32x8xf32>
    %128 = vector.extract_strided_slice %123 {offsets = [0, 0, 0], sizes = [1, 8, 24], strides = [1, 1, 1]} : vector<2x8x24xf32> to vector<1x8x24xf32>
    %129 = vector.shape_cast %128 : vector<1x8x24xf32> to vector<8x24xf32>
    %cst_59 = arith.constant dense<0.000000e+00> : vector<32x24xf32>
    %130 = tpu.matmul %127, %129, %cst_59 {dimension_numbers = #tpu.dot_dimension_numbers<[1], [0], [0], [1], [0, 0, 1, 1], [], []>} : vector<32x8xf32>, vector<8x24xf32>, vector<32x24xf32> -> vector<32x24xf32>
    %131 = vector.extract_strided_slice %122 {offsets = [32, 0], sizes = [32, 8], strides = [1, 1]} : vector<64x8xf32> to vector<32x8xf32>
    %132 = vector.extract_strided_slice %123 {offsets = [1, 0, 0], sizes = [1, 8, 24], strides = [1, 1, 1]} : vector<2x8x24xf32> to vector<1x8x24xf32>
    %133 = vector.shape_cast %132 : vector<1x8x24xf32> to vector<8x24xf32>
    %cst_60 = arith.constant dense<0.000000e+00> : vector<32x24xf32>
    %134 = tpu.matmul %131, %133, %cst_60 {dimension_numbers = #tpu.dot_dimension_numbers<[1], [0], [0], [1], [0, 0, 1, 1], [], []>} : vector<32x8xf32>, vector<8x24xf32>, vector<32x24xf32> -> vector<32x24xf32>
    %135 = arith.addf %130, %134 : vector<32x24xf32>
    %136 = vector.broadcast %124 : vector<1x24xf32> to vector<32x24xf32>
    %137 = arith.addf %135, %136 : vector<32x24xf32>
    %138 = vector.extract_strided_slice %137 {offsets = [0, 0], sizes = [32, 8], strides = [1, 1]} : vector<32x24xf32> to vector<32x8xf32>
    %139 = vector.extract_strided_slice %137 {offsets = [0, 8], sizes = [32, 8], strides = [1, 1]} : vector<32x24xf32> to vector<32x8xf32>
    %140 = vector.extract_strided_slice %137 {offsets = [0, 16], sizes = [32, 8], strides = [1, 1]} : vector<32x24xf32> to vector<32x8xf32>
    %cst_61 = arith.constant 0.000000e+00 : f32
    %141 = vector.broadcast %cst_61 : f32 to vector<32x8xf32>
    %142 = arith.subf %141, %139 : vector<32x8xf32>
    %143 = math.exp %142 : vector<32x8xf32>
    %cst_62 = arith.constant 1.000000e+00 : f32
    %144 = vector.broadcast %cst_62 : f32 to vector<32x8xf32>
    %145 = arith.addf %144, %143 : vector<32x8xf32>
    %146 = tpu.reciprocal %145 {approx = true} : vector<32x8xf32> -> vector<32x8xf32>
    %147 = arith.addf %138, %146 : vector<32x8xf32>
    %148 = arith.addf %147, %140 : vector<32x8xf32>
    %cst_63 = arith.constant 0.000000e+00 : f32
    %149 = vector.broadcast %cst_63 : f32 to vector<32x8xf32>
    %150 = arith.maximumf %148, %149 : vector<32x8xf32>
    %151 = vector.broadcast %125 : vector<1x8xf32> to vector<32x8xf32>
    %152 = arith.mulf %150, %151 : vector<32x8xf32>
    %153 = vector.broadcast %126 : vector<1x8xf32> to vector<32x8xf32>
    %154 = arith.addf %152, %153 : vector<32x8xf32>
    %155 = vector.extract_strided_slice %122 {offsets = [32, 0], sizes = [32, 8], strides = [1, 1]} : vector<64x8xf32> to vector<32x8xf32>
    %156 = arith.addf %154, %155 : vector<32x8xf32>
    %c0_64 = arith.constant 0 : index
    %c0_65 = arith.constant 0 : index
    %157 = vector.load %arg19[%c0_64, %c0_65] : memref<32x8xf32, #tpu.memory_space<vmem>>, vector<32x8xf32>
    tpu.vector_store %arg19[%c0_64, %c0_65], %156 {strides = array<i32>} : memref<32x8xf32, #tpu.memory_space<vmem>>, vector<32x8xf32>,
    return
  }
}

</mosaic_0001>

<llo_original>
// kernel: tpu_custom_call.1
$region0: #{tpu_custom_call.1}
  #allocation0 [shape = 'u32[]', space=smem, size = 0x4, offset = 0x4, fixed_abs, tag = 'smem constant byte address 0x4 - core index']
  #allocation1 [shape = 'u32[72,128]{1,0:T(1,128)}', space=vmem, size = 0x9000, scoped, tag = 'internal scratch']
  %s0 = inlined_call_operand.vmem [shape: f32[256,4], index: 0, kind: input, shape index: {}]
  %s1 = inlined_call_operand.vmem [shape: f32[4,8], index: 1, kind: input, shape index: {}]
  %s2 = inlined_call_operand.vmem [shape: f32[1,8], index: 2, kind: input, shape index: {}]
  %s3 = inlined_call_operand.vmem [shape: f32[3,4,24], index: 3, kind: input, shape index: {}]
  %s4 = inlined_call_operand.vmem [shape: f32[1,24], index: 4, kind: input, shape index: {}]
  %s5 = inlined_call_operand.vmem [shape: f32[1,8], index: 5, kind: input, shape index: {}]
  %s6 = inlined_call_operand.vmem [shape: f32[1,8], index: 6, kind: input, shape index: {}]
  %s7 = inlined_call_operand.vmem [shape: f32[3,8,24], index: 7, kind: input, shape index: {}]
  %s8 = inlined_call_operand.vmem [shape: f32[1,24], index: 8, kind: input, shape index: {}]
  %s9 = inlined_call_operand.vmem [shape: f32[1,8], index: 9, kind: input, shape index: {}]
  %s10 = inlined_call_operand.vmem [shape: f32[1,8], index: 10, kind: input, shape index: {}]
  %s11 = inlined_call_operand.vmem [shape: f32[3,8,24], index: 11, kind: input, shape index: {}]
  %s12 = inlined_call_operand.vmem [shape: f32[1,24], index: 12, kind: input, shape index: {}]
  %s13 = inlined_call_operand.vmem [shape: f32[1,8], index: 13, kind: input, shape index: {}]
  %s14 = inlined_call_operand.vmem [shape: f32[1,8], index: 14, kind: input, shape index: {}]
  %s15 = inlined_call_operand.vmem [shape: f32[2,8,24], index: 15, kind: input, shape index: {}]
  %s16 = inlined_call_operand.vmem [shape: f32[1,24], index: 16, kind: input, shape index: {}]
  %s17 = inlined_call_operand.vmem [shape: f32[1,8], index: 17, kind: input, shape index: {}]
  %s18 = inlined_call_operand.vmem [shape: f32[1,8], index: 18, kind: input, shape index: {}]
  %s19 = inlined_call_operand.vmem [shape: f32[32,8], index: 19, kind: output, shape index: {}]
  %s20 = sld [smem:[#allocation0]]
  $region86: #{tpu_custom_call.1} parent=0
    _
  %s22 = ssub.s32 1, %s20
  %s23 = scalar_select 0, %s22, %s20
  // Predicated region
  $region2: #{tpu_custom_call.1} parent=0 // pred_check
    _
  $region3: #{tpu_custom_call.1} parent=0 // pred_check_branch
    %25 = sbr.rel (0) target = $region5
  $region4: #{tpu_custom_call.1} parent=0 // pred_region
    _
  $region5: #{tpu_custom_call.1} parent=0 // pred_fallthru
    _
  // Predicated region
  $region6: #{tpu_custom_call.1} parent=0 // pred_check
    _
  $region7: #{tpu_custom_call.1} parent=0 // pred_check_branch
    %27 = sbr.rel (0) target = $region9
  $region8: #{tpu_custom_call.1} parent=0 // pred_region
    _
  $region9: #{tpu_custom_call.1} parent=0 // pred_fallthru
    _
  // Predicated region
  $region10: #{tpu_custom_call.1} parent=0 // pred_check
    _
  $region11: #{tpu_custom_call.1} parent=0 // pred_check_branch
    %29 = sbr.rel (0) target = $region13
  $region12: #{tpu_custom_call.1} parent=0 // pred_region
    _
  $region13: #{tpu_custom_call.1} parent=0 // pred_fallthru
    _
  // Predicated region
  $region14: #{tpu_custom_call.1} parent=0 // pred_check
    _
  $region15: #{tpu_custom_call.1} parent=0 // pred_check_branch
    %31 = sbr.rel (0) target = $region17
  $region16: #{tpu_custom_call.1} parent=0 // pred_region
    _
  $region17: #{tpu_custom_call.1} parent=0 // pred_fallthru
    _
  // Predicated region
  $region18: #{tpu_custom_call.1} parent=0 // pred_check
    _
  $region19: #{tpu_custom_call.1} parent=0 // pred_check_branch
    %33 = sbr.rel (0) target = $region21
  $region20: #{tpu_custom_call.1} parent=0 // pred_region
    _
  $region21: #{tpu_custom_call.1} parent=0 // pred_fallthru
    _
  // Predicated region
  $region22: #{tpu_custom_call.1} parent=0 // pred_check
    _
  $region23: #{tpu_custom_call.1} parent=0 // pred_check_branch
    %35 = sbr.rel (0) target = $region25
  $region24: #{tpu_custom_call.1} parent=0 // pred_region
    _
  $region25: #{tpu_custom_call.1} parent=0 // pred_fallthru
    _
  // Predicated region
  $region26: #{tpu_custom_call.1} parent=0 // pred_check
    _
  $region27: #{tpu_custom_call.1} parent=0 // pred_check_branch
    %37 = sbr.rel (0) target = $region29
  $region28: #{tpu_custom_call.1} parent=0 // pred_region
    _
  $region29: #{tpu_custom_call.1} parent=0 // pred_fallthru
    _
  // Predicated region
  $region30: #{tpu_custom_call.1} parent=0 // pred_check
    _
  $region31: #{tpu_custom_call.1} parent=0 // pred_check_branch
    %39 = sbr.rel (0) target = $region33
  $region32: #{tpu_custom_call.1} parent=0 // pred_region
    _
  $region33: #{tpu_custom_call.1} parent=0 // pred_fallthru
    _
  // Predicated region
  $region34: #{tpu_custom_call.1} parent=0 // pred_check
    _
  $region35: #{tpu_custom_call.1} parent=0 // pred_check_branch
    %41 = sbr.rel (0) target = $region37
  $region36: #{tpu_custom_call.1} parent=0 // pred_region
    _
  $region37: #{tpu_custom_call.1} parent=0 // pred_fallthru
    _
  // Predicated region
  $region38: #{tpu_custom_call.1} parent=0 // pred_check
    _
  $region39: #{tpu_custom_call.1} parent=0 // pred_check_branch
    %43 = sbr.rel (0) target = $region41
  $region40: #{tpu_custom_call.1} parent=0 // pred_region
    _
  $region41: #{tpu_custom_call.1} parent=0 // pred_fallthru
    _
  // Predicated region
  $region42: #{tpu_custom_call.1} parent=0 // pred_check
    _
  $region43: #{tpu_custom_call.1} parent=0 // pred_check_branch
    %45 = sbr.rel (0) target = $region45
  $region44: #{tpu_custom_call.1} parent=0 // pred_region
    _
  $region45: #{tpu_custom_call.1} parent=0 // pred_fallthru
    _
  // Predicated region
  $region46: #{tpu_custom_call.1} parent=0 // pred_check
    _
  $region47: #{tpu_custom_call.1} parent=0 // pred_check_branch
    %47 = sbr.rel (0) target = $region49
  $region48: #{tpu_custom_call.1} parent=0 // pred_region
    _
  $region49: #{tpu_custom_call.1} parent=0 // pred_fallthru
    _
  // Predicated region
  $region50: #{tpu_custom_call.1} parent=0 // pred_check
    _
  $region51: #{tpu_custom_call.1} parent=0 // pred_check_branch
    %49 = sbr.rel (0) target = $region53
  $region52: #{tpu_custom_call.1} parent=0 // pred_region
    _
  $region53: #{tpu_custom_call.1} parent=0 // pred_fallthru
    _
  // Predicated region
  $region54: #{tpu_custom_call.1} parent=0 // pred_check
    _
  $region55: #{tpu_custom_call.1} parent=0 // pred_check_branch
    %51 = sbr.rel (0) target = $region57
  $region56: #{tpu_custom_call.1} parent=0 // pred_region
    _
  $region57: #{tpu_custom_call.1} parent=0 // pred_fallthru
    _
  // Predicated region
  $region58: #{tpu_custom_call.1} parent=0 // pred_check
    _
  $region59: #{tpu_custom_call.1} parent=0 // pred_check_branch
    %53 = sbr.rel (0) target = $region61
  $region60: #{tpu_custom_call.1} parent=0 // pred_region
    _
  $region61: #{tpu_custom_call.1} parent=0 // pred_fallthru
    _
  // Predicated region
  $region62: #{tpu_custom_call.1} parent=0 // pred_check
    _
  $region63: #{tpu_custom_call.1} parent=0 // pred_check_branch
    %55 = sbr.rel (0) target = $region65
  $region64: #{tpu_custom_call.1} parent=0 // pred_region
    _
  $region65: #{tpu_custom_call.1} parent=0 // pred_fallthru
    _
  // Predicated region
  $region66: #{tpu_custom_call.1} parent=0 // pred_check
    _
  $region67: #{tpu_custom_call.1} parent=0 // pred_check_branch
    %57 = sbr.rel (0) target = $region69
  $region68: #{tpu_custom_call.1} parent=0 // pred_region
    _
  $region69: #{tpu_custom_call.1} parent=0 // pred_fallthru
    _
  // Predicated region
  $region70: #{tpu_custom_call.1} parent=0 // pred_check
    _
  $region71: #{tpu_custom_call.1} parent=0 // pred_check_branch
    %59 = sbr.rel (0) target = $region73
  $region72: #{tpu_custom_call.1} parent=0 // pred_region
    _
  $region73: #{tpu_custom_call.1} parent=0 // pred_fallthru
    _
  // Predicated region
  $region74: #{tpu_custom_call.1} parent=0 // pred_check
    _
  $region75: #{tpu_custom_call.1} parent=0 // pred_check_branch
    %61 = sbr.rel (0) target = $region77
  $region76: #{tpu_custom_call.1} parent=0 // pred_region
    _
  $region77: #{tpu_custom_call.1} parent=0 // pred_fallthru
    _
  %v62 = vld [vmem:[%s0] sm:$0xff]
  %v63 = vld [vmem:[%s0 + $0x8] sm:$0xff]
  %v64 = vld [vmem:[%s0 + $0x10] sm:$0xff]
  %v65 = vld [vmem:[%s0 + $0x18] sm:$0xff]
  %v66 = vld [vmem:[%s0 + $0x20] sm:$0xff]
  %v67 = vld [vmem:[%s0 + $0x28] sm:$0xff]
  %v68 = vld [vmem:[%s0 + $0x30] sm:$0xff]
  %v69 = vld [vmem:[%s0 + $0x38] sm:$0xff]
  %v70 = vld [vmem:[%s0 + $0x40] sm:$0xff]
  %v71 = vld [vmem:[%s0 + $0x48] sm:$0xff]
  %v72 = vld [vmem:[%s0 + $0x50] sm:$0xff]
  %v73 = vld [vmem:[%s0 + $0x58] sm:$0xff]
  %v74 = vld [vmem:[%s0 + $0x60] sm:$0xff]
  %v75 = vld [vmem:[%s0 + $0x68] sm:$0xff]
  %v76 = vld [vmem:[%s0 + $0x70] sm:$0xff]
  %v77 = vld [vmem:[%s0 + $0x78] sm:$0xff]
  %v78 = vld [vmem:[%s0 + $0x80] sm:$0xff]
  %v79 = vld [vmem:[%s0 + $0x88] sm:$0xff]
  %v80 = vld [vmem:[%s0 + $0x90] sm:$0xff]
  %v81 = vld [vmem:[%s0 + $0x98] sm:$0xff]
  %v82 = vld [vmem:[%s0 + $0xa0] sm:$0xff]
  %v83 = vld [vmem:[%s0 + $0xa8] sm:$0xff]
  %v84 = vld [vmem:[%s0 + $0xb0] sm:$0xff]
  %v85 = vld [vmem:[%s0 + $0xb8] sm:$0xff]
  %v86 = vld [vmem:[%s0 + $0xc0] sm:$0xff]
  %v87 = vld [vmem:[%s0 + $0xc8] sm:$0xff]
  %v88 = vld [vmem:[%s0 + $0xd0] sm:$0xff]
  %v89 = vld [vmem:[%s0 + $0xd8] sm:$0xff]
  %v90 = vld [vmem:[%s0 + $0xe0] sm:$0xff]
  %v91 = vld [vmem:[%s0 + $0xe8] sm:$0xff]
  %v92 = vld [vmem:[%s0 + $0xf0] sm:$0xff]
  %v93 = vld [vmem:[%s0 + $0xf8] sm:$0xff]
  %v94 = vld [vmem:[%s1] sm:$0xf]
  %v95 = vld [vmem:[%s2] sm:$0x1]
  %v97 = vperm.slane %v95, 0
  %vm99 = vcmask 31744
  %v101 = vsel %vm99, %v62, 0
  %v104 = vsel %vm99, %v63, 0
  %v107 = vsel %vm99, %v64, 0
  %v110 = vsel %vm99, %v65, 0
  %v113 = vsel %vm99, %v66, 0
  %v116 = vsel %vm99, %v67, 0
  %v119 = vsel %vm99, %v68, 0
  %v122 = vsel %vm99, %v69, 0
  %v125 = vsel %vm99, %v70, 0
  %v128 = vsel %vm99, %v71, 0
  %v131 = vsel %vm99, %v72, 0
  %v134 = vsel %vm99, %v73, 0
  %v137 = vsel %vm99, %v74, 0
  %v140 = vsel %vm99, %v75, 0
  %v143 = vsel %vm99, %v76, 0
  %v146 = vsel %vm99, %v77, 0
  %v149 = vsel %vm99, %v78, 0
  %v152 = vsel %vm99, %v79, 0
  %v155 = vsel %vm99, %v80, 0
  %v158 = vsel %vm99, %v81, 0
  %v161 = vsel %vm99, %v82, 0
  %v164 = vsel %vm99, %v83, 0
  %v167 = vsel %vm99, %v84, 0
  %v170 = vsel %vm99, %v85, 0
  %v173 = vsel %vm99, %v86, 0
  %v176 = vsel %vm99, %v87, 0
  %v179 = vsel %vm99, %v88, 0
  %v182 = vsel %vm99, %v89, 0
  %v185 = vsel %vm99, %v90, 0
  %v188 = vsel %vm99, %v91, 0
  %v191 = vsel %vm99, %v92, 0
  %v194 = vsel %vm99, %v93, 0
  %vm196 = vcmask 1043456
  %v198 = vsel %vm196, %v94, 0
  %200 = vmatpush.msra.mxu0 0.0
  %201 = vmatpush.msra.mxu0 0.0
  %202 = vmatpush.msra.mxu0 0.0
  %203 = vmatpush.msra.mxu0 0.0
  %204 = vmatpush.msra.mxu0 0.0
  %205 = vmatpush.msra.mxu0 0.0
  %206 = vmatpush.msra.mxu0 0.0
  %207 = vmatpush.msra.mxu0 0.0
  %208 = vmatpush.msra.mxu0 0.0
  %209 = vmatpush.msra.mxu0 0.0
  %210 = vmatpush.msra.mxu0 0.0
  %211 = vmatpush.msra.mxu0 0.0
  %212 = vmatpush.msra.mxu0 0.0
  %213 = vmatpush.msra.mxu0 0.0
  %214 = vmatpush.msra.mxu0 0.0
  %215 = vmatpush.msra.mxu0 %v198
  %216 = vmatmul.f32.gmra.mxu0 %v101
  %v217 = vpop.f32.mrf.mxu0
  %218 = vmatmul.f32.gmra.mxu0 %v104
  %v219 = vpop.f32.mrf.mxu0
  %220 = vmatmul.f32.gmra.mxu0 %v107
  %v221 = vpop.f32.mrf.mxu0
  %222 = vmatmul.f32.gmra.mxu0 %v110
  %v223 = vpop.f32.mrf.mxu0
  %224 = vmatmul.f32.gmra.mxu0 %v113
  %v225 = vpop.f32.mrf.mxu0
  %226 = vmatmul.f32.gmra.mxu0 %v116
  %v227 = vpop.f32.mrf.mxu0
  %228 = vmatmul.f32.gmra.mxu0 %v119
  %v229 = vpop.f32.mrf.mxu0
  %230 = vmatmul.f32.gmra.mxu0 %v122
  %v231 = vpop.f32.mrf.mxu0
  %232 = vmatmul.f32.gmra.mxu0 %v125
  %v233 = vpop.f32.mrf.mxu0
  %v234 = vadd.f32 %v97, %v233
  %235 = vmatmul.f32.gmra.mxu0 %v128
  %v236 = vpop.f32.mrf.mxu0
  %v237 = vadd.f32 %v97, %v236
  %238 = vmatmul.f32.gmra.mxu0 %v131
  %v239 = vpop.f32.mrf.mxu0
  %v240 = vadd.f32 %v97, %v239
  %241 = vmatmul.f32.gmra.mxu0 %v134
  %v242 = vpop.f32.mrf.mxu0
  %v243 = vadd.f32 %v97, %v242
  %244 = vmatmul.f32.gmra.mxu0 %v137
  %v245 = vpop.f32.mrf.mxu0
  %v246 = vadd.f32 %v97, %v245
  %247 = vmatmul.f32.gmra.mxu0 %v140
  %v248 = vpop.f32.mrf.mxu0
  %v249 = vadd.f32 %v97, %v248
  %250 = vmatmul.f32.gmra.mxu0 %v143
  %v251 = vpop.f32.mrf.mxu0
  %v252 = vadd.f32 %v97, %v251
  %253 = vmatmul.f32.gmra.mxu0 %v146
  %v254 = vpop.f32.mrf.mxu0
  %v255 = vadd.f32 %v97, %v254
  %256 = vmatmul.f32.gmra.mxu0 %v149
  %v257 = vpop.f32.mrf.mxu0
  %v258 = vadd.f32 %v97, %v257
  %259 = vmatmul.f32.gmra.mxu0 %v152
  %v260 = vpop.f32.mrf.mxu0
  %v261 = vadd.f32 %v97, %v260
  %262 = vmatmul.f32.gmra.mxu0 %v155
  %v263 = vpop.f32.mrf.mxu0
  %v264 = vadd.f32 %v97, %v263
  %265 = vmatmul.f32.gmra.mxu0 %v158
  %v266 = vpop.f32.mrf.mxu0
  %v267 = vadd.f32 %v97, %v266
  %268 = vmatmul.f32.gmra.mxu0 %v161
  %v269 = vpop.f32.mrf.mxu0
  %v270 = vadd.f32 %v97, %v269
  %271 = vmatmul.f32.gmra.mxu0 %v164
  %v272 = vpop.f32.mrf.mxu0
  %v273 = vadd.f32 %v97, %v272
  %274 = vmatmul.f32.gmra.mxu0 %v167
  %v275 = vpop.f32.mrf.mxu0
  %v276 = vadd.f32 %v97, %v275
  %277 = vmatmul.f32.gmra.mxu0 %v170
  %v278 = vpop.f32.mrf.mxu0
  %v279 = vadd.f32 %v97, %v278
  %280 = vmatmul.f32.gmra.mxu0 %v173
  %v281 = vpop.f32.mrf.mxu0
  %v282 = vadd.f32 %v97, %v281
  %283 = vmatmul.f32.gmra.mxu0 %v176
  %v284 = vpop.f32.mrf.mxu0
  %v285 = vadd.f32 %v97, %v284
  %286 = vmatmul.f32.gmra.mxu0 %v179
  %v287 = vpop.f32.mrf.mxu0
  %v288 = vadd.f32 %v97, %v287
  %289 = vmatmul.f32.gmra.mxu0 %v182
  %v290 = vpop.f32.mrf.mxu0
  %v291 = vadd.f32 %v97, %v290
  %292 = vmatmul.f32.gmra.mxu0 %v185
  %v293 = vpop.f32.mrf.mxu0
  %v294 = vadd.f32 %v97, %v293
  %295 = vmatmul.f32.gmra.mxu0 %v188
  %v296 = vpop.f32.mrf.mxu0
  %v297 = vadd.f32 %v97, %v296
  %298 = vmatmul.f32.gmra.mxu0 %v191
  %v299 = vpop.f32.mrf.mxu0
  %v300 = vadd.f32 %v97, %v299
  %301 = vmatmul.f32.gmra.mxu0 %v194
  %v302 = vpop.f32.mrf.mxu0
  %v303 = vadd.f32 %v97, %v302
  %304 = vdwg.mxu0
  %v305 = vld [vmem:[%s3] sm:$0xf]
  %v306 = vld [vmem:[%s3 + $0x4] sm:$0xf]
  %v307 = vld [vmem:[%s3 + $0x8] sm:$0xf]
  %v308 = vld [vmem:[%s4] sm:$0x1]
  %v309 = vld [vmem:[%s5] sm:$0x1]
  %v310 = vld [vmem:[%s6] sm:$0x1]
  %v312 = vsel %vm196, %v306, 0
  %314 = vmatpush.msra.mxu0 0.0
  %315 = vmatpush.msra.mxu0 0.0
  %316 = vmatpush.msra.mxu0 0.0
  %317 = vmatpush.msra.mxu0 0.0
  %318 = vmatpush.msra.mxu0 0.0
  %319 = vmatpush.msra.mxu0 0.0
  %320 = vmatpush.msra.mxu0 0.0
  %321 = vmatpush.msra.mxu0 0.0
  %322 = vmatpush.msra.mxu0 0.0
  %323 = vmatpush.msra.mxu0 0.0
  %324 = vmatpush.msra.mxu0 0.0
  %325 = vmatpush.msra.mxu0 0.0
  %326 = vmatpush.msra.mxu0 0.0
  %327 = vmatpush.msra.mxu0 0.0
  %328 = vmatpush.msra.mxu0 0.0
  %329 = vmatpush.msra.mxu0 %v312
  %330 = vmatmul.f32.gmra.mxu0 %v113
  %v331 = vpop.f32.mrf.mxu0
  %v332 = vadd.f32 0.0, %v331
  %333 = vmatmul.f32.gmra.mxu0 %v116
  %v334 = vpop.f32.mrf.mxu0
  %v335 = vadd.f32 0.0, %v334
  %336 = vmatmul.f32.gmra.mxu0 %v119
  %v337 = vpop.f32.mrf.mxu0
  %v338 = vadd.f32 0.0, %v337
  %339 = vmatmul.f32.gmra.mxu0 %v122
  %v340 = vpop.f32.mrf.mxu0
  %v341 = vadd.f32 0.0, %v340
  %342 = vmatmul.f32.gmra.mxu0 %v125
  %v343 = vpop.f32.mrf.mxu0
  %v344 = vadd.f32 0.0, %v343
  %345 = vmatmul.f32.gmra.mxu0 %v128
  %v346 = vpop.f32.mrf.mxu0
  %v347 = vadd.f32 0.0, %v346
  %348 = vmatmul.f32.gmra.mxu0 %v131
  %v349 = vpop.f32.mrf.mxu0
  %v350 = vadd.f32 0.0, %v349
  %351 = vmatmul.f32.gmra.mxu0 %v134
  %v352 = vpop.f32.mrf.mxu0
  %v353 = vadd.f32 0.0, %v352
  %354 = vmatmul.f32.gmra.mxu0 %v137
  %v355 = vpop.f32.mrf.mxu0
  %v356 = vadd.f32 0.0, %v355
  %357 = vmatmul.f32.gmra.mxu0 %v140
  %v358 = vpop.f32.mrf.mxu0
  %v359 = vadd.f32 0.0, %v358
  %360 = vmatmul.f32.gmra.mxu0 %v143
  %v361 = vpop.f32.mrf.mxu0
  %v362 = vadd.f32 0.0, %v361
  %363 = vmatmul.f32.gmra.mxu0 %v146
  %v364 = vpop.f32.mrf.mxu0
  %v365 = vadd.f32 0.0, %v364
  %366 = vmatmul.f32.gmra.mxu0 %v149
  %v367 = vpop.f32.mrf.mxu0
  %v368 = vadd.f32 0.0, %v367
  %369 = vmatmul.f32.gmra.mxu0 %v152
  %v370 = vpop.f32.mrf.mxu0
  %v371 = vadd.f32 0.0, %v370
  %372 = vmatmul.f32.gmra.mxu0 %v155
  %v373 = vpop.f32.mrf.mxu0
  %v374 = vadd.f32 0.0, %v373
  %375 = vmatmul.f32.gmra.mxu0 %v158
  %v376 = vpop.f32.mrf.mxu0
  %v377 = vadd.f32 0.0, %v376
  %378 = vmatmul.f32.gmra.mxu0 %v161
  %v379 = vpop.f32.mrf.mxu0
  %v380 = vadd.f32 0.0, %v379
  %381 = vmatmul.f32.gmra.mxu0 %v164
  %v382 = vpop.f32.mrf.mxu0
  %v383 = vadd.f32 0.0, %v382
  %384 = vmatmul.f32.gmra.mxu0 %v167
  %v385 = vpop.f32.mrf.mxu0
  %v386 = vadd.f32 0.0, %v385
  %387 = vmatmul.f32.gmra.mxu0 %v170
  %v388 = vpop.f32.mrf.mxu0
  %v389 = vadd.f32 0.0, %v388
  %390 = vmatmul.f32.gmra.mxu0 %v173
  %v391 = vpop.f32.mrf.mxu0
  %v392 = vadd.f32 0.0, %v391
  %393 = vmatmul.f32.gmra.mxu0 %v176
  %v394 = vpop.f32.mrf.mxu0
  %v395 = vadd.f32 0.0, %v394
  %396 = vmatmul.f32.gmra.mxu0 %v179
  %v397 = vpop.f32.mrf.mxu0
  %v398 = vadd.f32 0.0, %v397
  %399 = vmatmul.f32.gmra.mxu0 %v182
  %v400 = vpop.f32.mrf.mxu0
  %v401 = vadd.f32 0.0, %v400
  %402 = vdwg.mxu0
  %v404 = vsel %vm196, %v305, 0
  %406 = vmatpush.msra.mxu0 0.0
  %407 = vmatpush.msra.mxu0 0.0
  %408 = vmatpush.msra.mxu0 0.0
  %409 = vmatpush.msra.mxu0 0.0
  %410 = vmatpush.msra.mxu0 0.0
  %411 = vmatpush.msra.mxu0 0.0
  %412 = vmatpush.msra.mxu0 0.0
  %413 = vmatpush.msra.mxu0 0.0
  %414 = vmatpush.msra.mxu0 0.0
  %415 = vmatpush.msra.mxu0 0.0
  %416 = vmatpush.msra.mxu0 0.0
  %417 = vmatpush.msra.mxu0 0.0
  %418 = vmatpush.msra.mxu0 0.0
  %419 = vmatpush.msra.mxu0 0.0
  %420 = vmatpush.msra.mxu0 0.0
  %421 = vmatpush.msra.mxu0 %v404
  %422 = vmatmul.f32.gmra.mxu0 %v101
  %v423 = vpop.f32.mrf.mxu0
  %v424 = vadd.f32 %v332, %v423
  %425 = vmatmul.f32.gmra.mxu0 %v104
  %v426 = vpop.f32.mrf.mxu0
  %v427 = vadd.f32 %v335, %v426
  %428 = vmatmul.f32.gmra.mxu0 %v107
  %v429 = vpop.f32.mrf.mxu0
  %v430 = vadd.f32 %v338, %v429
  %431 = vmatmul.f32.gmra.mxu0 %v110
  %v432 = vpop.f32.mrf.mxu0
  %v433 = vadd.f32 %v341, %v432
  %434 = vmatmul.f32.gmra.mxu0 %v113
  %v435 = vpop.f32.mrf.mxu0
  %v436 = vadd.f32 %v344, %v435
  %437 = vmatmul.f32.gmra.mxu0 %v116
  %v438 = vpop.f32.mrf.mxu0
  %v439 = vadd.f32 %v347, %v438
  %440 = vmatmul.f32.gmra.mxu0 %v119
  %v441 = vpop.f32.mrf.mxu0
  %v442 = vadd.f32 %v350, %v441
  %443 = vmatmul.f32.gmra.mxu0 %v122
  %v444 = vpop.f32.mrf.mxu0
  %v445 = vadd.f32 %v353, %v444
  %446 = vmatmul.f32.gmra.mxu0 %v125
  %v447 = vpop.f32.mrf.mxu0
  %v448 = vadd.f32 %v356, %v447
  %449 = vmatmul.f32.gmra.mxu0 %v128
  %v450 = vpop.f32.mrf.mxu0
  %v451 = vadd.f32 %v359, %v450
  %452 = vmatmul.f32.gmra.mxu0 %v131
  %v453 = vpop.f32.mrf.mxu0
  %v454 = vadd.f32 %v362, %v453
  %455 = vmatmul.f32.gmra.mxu0 %v134
  %v456 = vpop.f32.mrf.mxu0
  %v457 = vadd.f32 %v365, %v456
  %458 = vmatmul.f32.gmra.mxu0 %v137
  %v459 = vpop.f32.mrf.mxu0
  %v460 = vadd.f32 %v368, %v459
  %461 = vmatmul.f32.gmra.mxu0 %v140
  %v462 = vpop.f32.mrf.mxu0
  %v463 = vadd.f32 %v371, %v462
  %464 = vmatmul.f32.gmra.mxu0 %v143
  %v465 = vpop.f32.mrf.mxu0
  %v466 = vadd.f32 %v374, %v465
  %467 = vmatmul.f32.gmra.mxu0 %v146
  %v468 = vpop.f32.mrf.mxu0
  %v469 = vadd.f32 %v377, %v468
  %470 = vmatmul.f32.gmra.mxu0 %v149
  %v471 = vpop.f32.mrf.mxu0
  %v472 = vadd.f32 %v380, %v471
  %473 = vmatmul.f32.gmra.mxu0 %v152
  %v474 = vpop.f32.mrf.mxu0
  %v475 = vadd.f32 %v383, %v474
  %476 = vmatmul.f32.gmra.mxu0 %v155
  %v477 = vpop.f32.mrf.mxu0
  %v478 = vadd.f32 %v386, %v477
  %479 = vmatmul.f32.gmra.mxu0 %v158
  %v480 = vpop.f32.mrf.mxu0
  %v481 = vadd.f32 %v389, %v480
  %482 = vmatmul.f32.gmra.mxu0 %v161
  %v483 = vpop.f32.mrf.mxu0
  %v484 = vadd.f32 %v392, %v483
  %485 = vmatmul.f32.gmra.mxu0 %v164
  %v486 = vpop.f32.mrf.mxu0
  %v487 = vadd.f32 %v395, %v486
  %488 = vmatmul.f32.gmra.mxu0 %v167
  %v489 = vpop.f32.mrf.mxu0
  %v490 = vadd.f32 %v398, %v489
  %491 = vmatmul.f32.gmra.mxu0 %v170
  %v492 = vpop.f32.mrf.mxu0
  %v493 = vadd.f32 %v401, %v492
  %494 = vdwg.mxu0
  %v496 = vsel %vm196, %v307, 0
  %498 = vmatpush.msra.mxu0 0.0
  %499 = vmatpush.msra.mxu0 0.0
  %500 = vmatpush.msra.mxu0 0.0
  %501 = vmatpush.msra.mxu0 0.0
  %502 = vmatpush.msra.mxu0 0.0
  %503 = vmatpush.msra.mxu0 0.0
  %504 = vmatpush.msra.mxu0 0.0
  %505 = vmatpush.msra.mxu0 0.0
  %506 = vmatpush.msra.mxu0 0.0
  %507 = vmatpush.msra.mxu0 0.0
  %508 = vmatpush.msra.mxu0 0.0
  %509 = vmatpush.msra.mxu0 0.0
  %510 = vmatpush.msra.mxu0 0.0
  %511 = vmatpush.msra.mxu0 0.0
  %512 = vmatpush.msra.mxu0 0.0
  %513 = vmatpush.msra.mxu0 %v496
  %514 = vmatmul.f32.gmra.mxu0 %v125
  %v515 = vpop.f32.mrf.mxu0
  %v516 = vadd.f32 0.0, %v515
  %517 = vmatmul.f32.gmra.mxu0 %v128
  %v518 = vpop.f32.mrf.mxu0
  %v519 = vadd.f32 0.0, %v518
  %520 = vmatmul.f32.gmra.mxu0 %v131
  %v521 = vpop.f32.mrf.mxu0
  %v522 = vadd.f32 0.0, %v521
  %523 = vmatmul.f32.gmra.mxu0 %v134
  %v524 = vpop.f32.mrf.mxu0
  %v525 = vadd.f32 0.0, %v524
  %526 = vmatmul.f32.gmra.mxu0 %v137
  %v527 = vpop.f32.mrf.mxu0
  %v528 = vadd.f32 0.0, %v527
  %529 = vmatmul.f32.gmra.mxu0 %v140
  %v530 = vpop.f32.mrf.mxu0
  %v531 = vadd.f32 0.0, %v530
  %532 = vmatmul.f32.gmra.mxu0 %v143
  %v533 = vpop.f32.mrf.mxu0
  %v534 = vadd.f32 0.0, %v533
  %535 = vmatmul.f32.gmra.mxu0 %v146
  %v536 = vpop.f32.mrf.mxu0
  %v537 = vadd.f32 0.0, %v536
  %538 = vmatmul.f32.gmra.mxu0 %v149
  %v539 = vpop.f32.mrf.mxu0
  %v540 = vadd.f32 0.0, %v539
  %541 = vmatmul.f32.gmra.mxu0 %v152
  %v542 = vpop.f32.mrf.mxu0
  %v543 = vadd.f32 0.0, %v542
  %544 = vmatmul.f32.gmra.mxu0 %v155
  %v545 = vpop.f32.mrf.mxu0
  %v546 = vadd.f32 0.0, %v545
  %547 = vmatmul.f32.gmra.mxu0 %v158
  %v548 = vpop.f32.mrf.mxu0
  %v549 = vadd.f32 0.0, %v548
  %550 = vmatmul.f32.gmra.mxu0 %v161
  %v551 = vpop.f32.mrf.mxu0
  %v552 = vadd.f32 0.0, %v551
  %553 = vmatmul.f32.gmra.mxu0 %v164
  %v554 = vpop.f32.mrf.mxu0
  %v555 = vadd.f32 0.0, %v554
  %556 = vmatmul.f32.gmra.mxu0 %v167
  %v557 = vpop.f32.mrf.mxu0
  %v558 = vadd.f32 0.0, %v557
  %559 = vmatmul.f32.gmra.mxu0 %v170
  %v560 = vpop.f32.mrf.mxu0
  %v561 = vadd.f32 0.0, %v560
  %562 = vmatmul.f32.gmra.mxu0 %v173
  %v563 = vpop.f32.mrf.mxu0
  %v564 = vadd.f32 0.0, %v563
  %565 = vmatmul.f32.gmra.mxu0 %v176
  %v566 = vpop.f32.mrf.mxu0
  %v567 = vadd.f32 0.0, %v566
  %568 = vmatmul.f32.gmra.mxu0 %v179
  %v569 = vpop.f32.mrf.mxu0
  %v570 = vadd.f32 0.0, %v569
  %571 = vmatmul.f32.gmra.mxu0 %v182
  %v572 = vpop.f32.mrf.mxu0
  %v573 = vadd.f32 0.0, %v572
  %574 = vmatmul.f32.gmra.mxu0 %v185
  %v575 = vpop.f32.mrf.mxu0
  %v576 = vadd.f32 0.0, %v575
  %577 = vmatmul.f32.gmra.mxu0 %v188
  %v578 = vpop.f32.mrf.mxu0
  %v579 = vadd.f32 0.0, %v578
  %580 = vmatmul.f32.gmra.mxu0 %v191
  %v581 = vpop.f32.mrf.mxu0
  %v582 = vadd.f32 0.0, %v581
  %583 = vmatmul.f32.gmra.mxu0 %v194
  %v584 = vpop.f32.mrf.mxu0
  %v585 = vadd.f32 0.0, %v584
  %586 = vdwg.mxu0
  %v587 = vadd.f32 %v424, %v516
  %v588 = vadd.f32 %v427, %v519
  %v589 = vadd.f32 %v430, %v522
  %v590 = vadd.f32 %v433, %v525
  %v591 = vadd.f32 %v436, %v528
  %v592 = vadd.f32 %v439, %v531
  %v593 = vadd.f32 %v442, %v534
  %v594 = vadd.f32 %v445, %v537
  %v595 = vadd.f32 %v448, %v540
  %v596 = vadd.f32 %v451, %v543
  %v597 = vadd.f32 %v454, %v546
  %v598 = vadd.f32 %v457, %v549
  %v599 = vadd.f32 %v460, %v552
  %v600 = vadd.f32 %v463, %v555
  %v601 = vadd.f32 %v466, %v558
  %v602 = vadd.f32 %v469, %v561
  %v603 = vadd.f32 %v472, %v564
  %v604 = vadd.f32 %v475, %v567
  %v605 = vadd.f32 %v478, %v570
  %v606 = vadd.f32 %v481, %v573
  %v607 = vadd.f32 %v484, %v576
  %v608 = vadd.f32 %v487, %v579
  %v609 = vadd.f32 %v490, %v582
  %v610 = vadd.f32 %v493, %v585
  %v612 = vperm.slane %v308, 0
  %v614 = vadd.f32 %v587, %v612
  %v615 = vadd.f32 %v588, %v612
  %v616 = vadd.f32 %v589, %v612
  %v617 = vadd.f32 %v590, %v612
  %v618 = vadd.f32 %v591, %v612
  %v619 = vadd.f32 %v592, %v612
  %v620 = vadd.f32 %v593, %v612
  %v621 = vadd.f32 %v594, %v612
  %v622 = vadd.f32 %v595, %v612
  %v623 = vadd.f32 %v596, %v612
  %v624 = vadd.f32 %v597, %v612
  %v625 = vadd.f32 %v598, %v612
  %v626 = vadd.f32 %v599, %v612
  %v627 = vadd.f32 %v600, %v612
  %v628 = vadd.f32 %v601, %v612
  %v629 = vadd.f32 %v602, %v612
  %v630 = vadd.f32 %v603, %v612
  %v631 = vadd.f32 %v604, %v612
  %v632 = vadd.f32 %v605, %v612
  %v633 = vadd.f32 %v606, %v612
  %v634 = vadd.f32 %v607, %v612
  %v635 = vadd.f32 %v608, %v612
  %v636 = vadd.f32 %v609, %v612
  %v637 = vadd.f32 %v610, %v612
  %v638 = vsub.f32 0.0, %v614
  %v639 = vsub.f32 0.0, %v615
  %v640 = vsub.f32 0.0, %v616
  %v641 = vsub.f32 0.0, %v617
  %v642 = vsub.f32 0.0, %v618
  %v643 = vsub.f32 0.0, %v619
  %v644 = vsub.f32 0.0, %v620
  %v645 = vsub.f32 0.0, %v621
  %v646 = vsub.f32 0.0, %v622
  %v647 = vsub.f32 0.0, %v623
  %v648 = vsub.f32 0.0, %v624
  %v649 = vsub.f32 0.0, %v625
  %v650 = vsub.f32 0.0, %v626
  %v651 = vsub.f32 0.0, %v627
  %v652 = vsub.f32 0.0, %v628
  %v653 = vsub.f32 0.0, %v629
  %v654 = vsub.f32 0.0, %v630
  %v655 = vsub.f32 0.0, %v631
  %v656 = vsub.f32 0.0, %v632
  %v657 = vsub.f32 0.0, %v633
  %v658 = vsub.f32 0.0, %v634
  %v659 = vsub.f32 0.0, %v635
  %v660 = vsub.f32 0.0, %v636
  %v661 = vsub.f32 0.0, %v637
  %v662 = vmul.f32 %v638, 1.442695
  %v663 = vpow.pop %v662
  %v664 = vmul.f32 %v639, 1.442695
  %v665 = vpow.pop %v664
  %v666 = vmul.f32 %v640, 1.442695
  %v667 = vpow.pop %v666
  %v668 = vmul.f32 %v641, 1.442695
  %v669 = vpow.pop %v668
  %v670 = vmul.f32 %v642, 1.442695
  %v671 = vpow.pop %v670
  %v672 = vmul.f32 %v643, 1.442695
  %v673 = vpow.pop %v672
  %v674 = vmul.f32 %v644, 1.442695
  %v675 = vpow.pop %v674
  %v676 = vmul.f32 %v645, 1.442695
  %v677 = vpow.pop %v676
  %v678 = vmul.f32 %v646, 1.442695
  %v679 = vpow.pop %v678
  %v680 = vmul.f32 %v647, 1.442695
  %v681 = vpow.pop %v680
  %v682 = vmul.f32 %v648, 1.442695
  %v683 = vpow.pop %v682
  %v684 = vmul.f32 %v649, 1.442695
  %v685 = vpow.pop %v684
  %v686 = vmul.f32 %v650, 1.442695
  %v687 = vpow.pop %v686
  %v688 = vmul.f32 %v651, 1.442695
  %v689 = vpow.pop %v688
  %v690 = vmul.f32 %v652, 1.442695
  %v691 = vpow.pop %v690
  %v692 = vmul.f32 %v653, 1.442695
  %v693 = vpow.pop %v692
  %v694 = vmul.f32 %v654, 1.442695
  %v695 = vpow.pop %v694
  %v696 = vmul.f32 %v655, 1.442695
  %v697 = vpow.pop %v696
  %v698 = vmul.f32 %v656, 1.442695
  %v699 = vpow.pop %v698
  %v700 = vmul.f32 %v657, 1.442695
  %v701 = vpow.pop %v700
  %v702 = vmul.f32 %v658, 1.442695
  %v703 = vpow.pop %v702
  %v704 = vmul.f32 %v659, 1.442695
  %v705 = vpow.pop %v704
  %v706 = vmul.f32 %v660, 1.442695
  %v707 = vpow.pop %v706
  %v708 = vmul.f32 %v661, 1.442695
  %v709 = vpow.pop %v708
  %v710 = vadd.f32 %v663, 1.0
  %v711 = vadd.f32 %v665, 1.0
  %v712 = vadd.f32 %v667, 1.0
  %v713 = vadd.f32 %v669, 1.0
  %v714 = vadd.f32 %v671, 1.0
  %v715 = vadd.f32 %v673, 1.0
  %v716 = vadd.f32 %v675, 1.0
  %v717 = vadd.f32 %v677, 1.0
  %v718 = vadd.f32 %v679, 1.0
  %v719 = vadd.f32 %v681, 1.0
  %v720 = vadd.f32 %v683, 1.0
  %v721 = vadd.f32 %v685, 1.0
  %v722 = vadd.f32 %v687, 1.0
  %v723 = vadd.f32 %v689, 1.0
  %v724 = vadd.f32 %v691, 1.0
  %v725 = vadd.f32 %v693, 1.0
  %v726 = vadd.f32 %v695, 1.0
  %v727 = vadd.f32 %v697, 1.0
  %v728 = vadd.f32 %v699, 1.0
  %v729 = vadd.f32 %v701, 1.0
  %v730 = vadd.f32 %v703, 1.0
  %v731 = vadd.f32 %v705, 1.0
  %v732 = vadd.f32 %v707, 1.0
  %v733 = vadd.f32 %v709, 1.0
  %v734 = vrcp.pop %v710
  %v735 = vrcp.pop %v711
  %v736 = vrcp.pop %v712
  %v737 = vrcp.pop %v713
  %v738 = vrcp.pop %v714
  %v739 = vrcp.pop %v715
  %v740 = vrcp.pop %v716
  %v741 = vrcp.pop %v717
  %v742 = vrcp.pop %v718
  %v743 = vrcp.pop %v719
  %v744 = vrcp.pop %v720
  %v745 = vrcp.pop %v721
  %v746 = vrcp.pop %v722
  %v747 = vrcp.pop %v723
  %v748 = vrcp.pop %v724
  %v749 = vrcp.pop %v725
  %v750 = vrcp.pop %v726
  %v751 = vrcp.pop %v727
  %v752 = vrcp.pop %v728
  %v753 = vrcp.pop %v729
  %v754 = vrcp.pop %v730
  %v755 = vrcp.pop %v731
  %v756 = vrcp.pop %v732
  %v757 = vrcp.pop %v733
  %782 = vrot.lane.b32.xlu0 %v734, 120
  %v783 = vpop.permute.xlu0 %782
  %784 = vrot.lane.b32.xlu0 %v735, 120
  %v785 = vpop.permute.xlu0 %784
  %786 = vrot.lane.b32.xlu0 %v736, 120
  %v787 = vpop.permute.xlu0 %786
  %788 = vrot.lane.b32.xlu0 %v737, 120
  %v789 = vpop.permute.xlu0 %788
  %790 = vrot.lane.b32.xlu0 %v738, 120
  %v791 = vpop.permute.xlu0 %790
  %792 = vrot.lane.b32.xlu0 %v739, 120
  %v793 = vpop.permute.xlu0 %792
  %794 = vrot.lane.b32.xlu0 %v740, 120
  %v795 = vpop.permute.xlu0 %794
  %796 = vrot.lane.b32.xlu0 %v741, 120
  %v797 = vpop.permute.xlu0 %796
  %798 = vrot.lane.b32.xlu0 %v742, 120
  %v799 = vpop.permute.xlu0 %798
  %800 = vrot.lane.b32.xlu0 %v743, 120
  %v801 = vpop.permute.xlu0 %800
  %802 = vrot.lane.b32.xlu0 %v744, 120
  %v803 = vpop.permute.xlu0 %802
  %804 = vrot.lane.b32.xlu0 %v745, 120
  %v805 = vpop.permute.xlu0 %804
  %806 = vrot.lane.b32.xlu0 %v746, 120
  %v807 = vpop.permute.xlu0 %806
  %808 = vrot.lane.b32.xlu0 %v747, 120
  %v809 = vpop.permute.xlu0 %808
  %810 = vrot.lane.b32.xlu0 %v748, 120
  %v811 = vpop.permute.xlu0 %810
  %812 = vrot.lane.b32.xlu0 %v749, 120
  %v813 = vpop.permute.xlu0 %812
  %814 = vrot.lane.b32.xlu0 %v750, 120
  %v815 = vpop.permute.xlu0 %814
  %816 = vrot.lane.b32.xlu0 %v751, 120
  %v817 = vpop.permute.xlu0 %816
  %818 = vrot.lane.b32.xlu0 %v752, 120
  %v819 = vpop.permute.xlu0 %818
  %820 = vrot.lane.b32.xlu0 %v753, 120
  %v821 = vpop.permute.xlu0 %820
  %822 = vrot.lane.b32.xlu0 %v754, 120
  %v823 = vpop.permute.xlu0 %822
  %824 = vrot.lane.b32.xlu0 %v755, 120
  %v825 = vpop.permute.xlu0 %824
  %826 = vrot.lane.b32.xlu0 %v756, 120
  %v827 = vpop.permute.xlu0 %826
  %828 = vrot.lane.b32.xlu0 %v757, 120
  %v829 = vpop.permute.xlu0 %828
  %v854 = vadd.f32 %v614, %v783
  %v855 = vadd.f32 %v615, %v785
  %v856 = vadd.f32 %v616, %v787
  %v857 = vadd.f32 %v617, %v789
  %v858 = vadd.f32 %v618, %v791
  %v859 = vadd.f32 %v619, %v793
  %v860 = vadd.f32 %v620, %v795
  %v861 = vadd.f32 %v621, %v797
  %v862 = vadd.f32 %v622, %v799
  %v863 = vadd.f32 %v623, %v801
  %v864 = vadd.f32 %v624, %v803
  %v865 = vadd.f32 %v625, %v805
  %v866 = vadd.f32 %v626, %v807
  %v867 = vadd.f32 %v627, %v809
  %v868 = vadd.f32 %v628, %v811
  %v869 = vadd.f32 %v629, %v813
  %v870 = vadd.f32 %v630, %v815
  %v871 = vadd.f32 %v631, %v817
  %v872 = vadd.f32 %v632, %v819
  %v873 = vadd.f32 %v633, %v821
  %v874 = vadd.f32 %v634, %v823
  %v875 = vadd.f32 %v635, %v825
  %v876 = vadd.f32 %v636, %v827
  %v877 = vadd.f32 %v637, %v829
  %902 = vrot.lane.b32.xlu0 %v614, 112
  %v903 = vpop.permute.xlu0 %902
  %904 = vrot.lane.b32.xlu0 %v615, 112
  %v905 = vpop.permute.xlu0 %904
  %906 = vrot.lane.b32.xlu0 %v616, 112
  %v907 = vpop.permute.xlu0 %906
  %908 = vrot.lane.b32.xlu0 %v617, 112
  %v909 = vpop.permute.xlu0 %908
  %910 = vrot.lane.b32.xlu0 %v618, 112
  %v911 = vpop.permute.xlu0 %910
  %912 = vrot.lane.b32.xlu0 %v619, 112
  %v913 = vpop.permute.xlu0 %912
  %914 = vrot.lane.b32.xlu0 %v620, 112
  %v915 = vpop.permute.xlu0 %914
  %916 = vrot.lane.b32.xlu0 %v621, 112
  %v917 = vpop.permute.xlu0 %916
  %918 = vrot.lane.b32.xlu0 %v622, 112
  %v919 = vpop.permute.xlu0 %918
  %920 = vrot.lane.b32.xlu0 %v623, 112
  %v921 = vpop.permute.xlu0 %920
  %922 = vrot.lane.b32.xlu0 %v624, 112
  %v923 = vpop.permute.xlu0 %922
  %924 = vrot.lane.b32.xlu0 %v625, 112
  %v925 = vpop.permute.xlu0 %924
  %926 = vrot.lane.b32.xlu0 %v626, 112
  %v927 = vpop.permute.xlu0 %926
  %928 = vrot.lane.b32.xlu0 %v627, 112
  %v929 = vpop.permute.xlu0 %928
  %930 = vrot.lane.b32.xlu0 %v628, 112
  %v931 = vpop.permute.xlu0 %930
  %932 = vrot.lane.b32.xlu0 %v629, 112
  %v933 = vpop.permute.xlu0 %932
  %934 = vrot.lane.b32.xlu0 %v630, 112
  %v935 = vpop.permute.xlu0 %934
  %936 = vrot.lane.b32.xlu0 %v631, 112
  %v937 = vpop.permute.xlu0 %936
  %938 = vrot.lane.b32.xlu0 %v632, 112
  %v939 = vpop.permute.xlu0 %938
  %940 = vrot.lane.b32.xlu0 %v633, 112
  %v941 = vpop.permute.xlu0 %940
  %942 = vrot.lane.b32.xlu0 %v634, 112
  %v943 = vpop.permute.xlu0 %942
  %944 = vrot.lane.b32.xlu0 %v635, 112
  %v945 = vpop.permute.xlu0 %944
  %946 = vrot.lane.b32.xlu0 %v636, 112
  %v947 = vpop.permute.xlu0 %946
  %948 = vrot.lane.b32.xlu0 %v637, 112
  %v949 = vpop.permute.xlu0 %948
  %v974 = vadd.f32 %v854, %v903
  %v975 = vadd.f32 %v855, %v905
  %v976 = vadd.f32 %v856, %v907
  %v977 = vadd.f32 %v857, %v909
  %v978 = vadd.f32 %v858, %v911
  %v979 = vadd.f32 %v859, %v913
  %v980 = vadd.f32 %v860, %v915
  %v981 = vadd.f32 %v861, %v917
  %v982 = vadd.f32 %v862, %v919
  %v983 = vadd.f32 %v863, %v921
  %v984 = vadd.f32 %v864, %v923
  %v985 = vadd.f32 %v865, %v925
  %v986 = vadd.f32 %v866, %v927
  %v987 = vadd.f32 %v867, %v929
  %v988 = vadd.f32 %v868, %v931
  %v989 = vadd.f32 %v869, %v933
  %v990 = vadd.f32 %v870, %v935
  %v991 = vadd.f32 %v871, %v937
  %v992 = vadd.f32 %v872, %v939
  %v993 = vadd.f32 %v873, %v941
  %v994 = vadd.f32 %v874, %v943
  %v995 = vadd.f32 %v875, %v945
  %v996 = vadd.f32 %v876, %v947
  %v997 = vadd.f32 %v877, %v949
  %v998 = vmax.f32 %v974, 0.0
  %v999 = vmax.f32 %v975, 0.0
  %v1000 = vmax.f32 %v976, 0.0
  %v1001 = vmax.f32 %v977, 0.0
  %v1002 = vmax.f32 %v978, 0.0
  %v1003 = vmax.f32 %v979, 0.0
  %v1004 = vmax.f32 %v980, 0.0
  %v1005 = vmax.f32 %v981, 0.0
  %v1006 = vmax.f32 %v982, 0.0
  %v1007 = vmax.f32 %v983, 0.0
  %v1008 = vmax.f32 %v984, 0.0
  %v1009 = vmax.f32 %v985, 0.0
  %v1010 = vmax.f32 %v986, 0.0
  %v1011 = vmax.f32 %v987, 0.0
  %v1012 = vmax.f32 %v988, 0.0
  %v1013 = vmax.f32 %v989, 0.0
  %v1014 = vmax.f32 %v990, 0.0
  %v1015 = vmax.f32 %v991, 0.0
  %v1016 = vmax.f32 %v992, 0.0
  %v1017 = vmax.f32 %v993, 0.0
  %v1018 = vmax.f32 %v994, 0.0
  %v1019 = vmax.f32 %v995, 0.0
  %v1020 = vmax.f32 %v996, 0.0
  %v1021 = vmax.f32 %v997, 0.0
  %v1023 = vperm.slane %v309, 0
  %v1025 = vmul.f32 %v998, %v1023
  %v1026 = vmul.f32 %v999, %v1023
  %v1027 = vmul.f32 %v1000, %v1023
  %v1028 = vmul.f32 %v1001, %v1023
  %v1029 = vmul.f32 %v1002, %v1023
  %v1030 = vmul.f32 %v1003, %v1023
  %v1031 = vmul.f32 %v1004, %v1023
  %v1032 = vmul.f32 %v1005, %v1023
  %v1033 = vmul.f32 %v1006, %v1023
  %v1034 = vmul.f32 %v1007, %v1023
  %v1035 = vmul.f32 %v1008, %v1023
  %v1036 = vmul.f32 %v1009, %v1023
  %v1037 = vmul.f32 %v1010, %v1023
  %v1038 = vmul.f32 %v1011, %v1023
  %v1039 = vmul.f32 %v1012, %v1023
  %v1040 = vmul.f32 %v1013, %v1023
  %v1041 = vmul.f32 %v1014, %v1023
  %v1042 = vmul.f32 %v1015, %v1023
  %v1043 = vmul.f32 %v1016, %v1023
  %v1044 = vmul.f32 %v1017, %v1023
  %v1045 = vmul.f32 %v1018, %v1023
  %v1046 = vmul.f32 %v1019, %v1023
  %v1047 = vmul.f32 %v1020, %v1023
  %v1048 = vmul.f32 %v1021, %v1023
  %v1050 = vperm.slane %v310, 0
  %v1052 = vadd.f32 %v1025, %v1050
  %v1053 = vadd.f32 %v1026, %v1050
  %v1054 = vadd.f32 %v1027, %v1050
  %v1055 = vadd.f32 %v1028, %v1050
  %v1056 = vadd.f32 %v1029, %v1050
  %v1057 = vadd.f32 %v1030, %v1050
  %v1058 = vadd.f32 %v1031, %v1050
  %v1059 = vadd.f32 %v1032, %v1050
  %v1060 = vadd.f32 %v1033, %v1050
  %v1061 = vadd.f32 %v1034, %v1050
  %v1062 = vadd.f32 %v1035, %v1050
  %v1063 = vadd.f32 %v1036, %v1050
  %v1064 = vadd.f32 %v1037, %v1050
  %v1065 = vadd.f32 %v1038, %v1050
  %v1066 = vadd.f32 %v1039, %v1050
  %v1067 = vadd.f32 %v1040, %v1050
  %v1068 = vadd.f32 %v1041, %v1050
  %v1069 = vadd.f32 %v1042, %v1050
  %v1070 = vadd.f32 %v1043, %v1050
  %v1071 = vadd.f32 %v1044, %v1050
  %v1072 = vadd.f32 %v1045, %v1050
  %v1073 = vadd.f32 %v1046, %v1050
  %v1074 = vadd.f32 %v1047, %v1050
  %v1075 = vadd.f32 %v1048, %v1050
  %v1076 = vadd.f32 %v1052, %v234
  %v1077 = vadd.f32 %v1053, %v237
  %v1078 = vadd.f32 %v1054, %v240
  %v1079 = vadd.f32 %v1055, %v243
  %v1080 = vadd.f32 %v1056, %v246
  %v1081 = vadd.f32 %v1057, %v249
  %v1082 = vadd.f32 %v1058, %v252
  %v1083 = vadd.f32 %v1059, %v255
  %v1084 = vadd.f32 %v1060, %v258
  %v1085 = vadd.f32 %v1061, %v261
  %v1086 = vadd.f32 %v1062, %v264
  %v1087 = vadd.f32 %v1063, %v267
  %v1088 = vadd.f32 %v1064, %v270
  %v1089 = vadd.f32 %v1065, %v273
  %v1090 = vadd.f32 %v1066, %v276
  %v1091 = vadd.f32 %v1067, %v279
  %v1092 = vadd.f32 %v1068, %v282
  %v1093 = vadd.f32 %v1069, %v285
  %v1094 = vadd.f32 %v1070, %v288
  %v1095 = vadd.f32 %v1071, %v291
  %v1096 = vadd.f32 %v1072, %v294
  %v1097 = vadd.f32 %v1073, %v297
  %v1098 = vadd.f32 %v1074, %v300
  %v1099 = vadd.f32 %v1075, %v303
  %v1100 = vld [vmem:[%s7] sm:$0xff]
  %v1101 = vld [vmem:[%s7 + $0x8] sm:$0xff]
  %v1102 = vld [vmem:[%s7 + $0x10] sm:$0xff]
  %v1103 = vld [vmem:[%s8] sm:$0x1]
  %v1104 = vld [vmem:[%s9] sm:$0x1]
  %v1105 = vld [vmem:[%s10] sm:$0x1]
  %vm1106 = vcmask 64512
  %v1108 = vsel %vm1106, %v1080, 0
  %v1111 = vsel %vm1106, %v1081, 0
  %v1114 = vsel %vm1106, %v1082, 0
  %v1117 = vsel %vm1106, %v1083, 0
  %v1120 = vsel %vm1106, %v1084, 0
  %v1123 = vsel %vm1106, %v1085, 0
  %v1126 = vsel %vm1106, %v1086, 0
  %v1129 = vsel %vm1106, %v1087, 0
  %v1132 = vsel %vm1106, %v1088, 0
  %v1135 = vsel %vm1106, %v1089, 0
  %v1138 = vsel %vm1106, %v1090, 0
  %v1141 = vsel %vm1106, %v1091, 0
  %v1144 = vsel %vm1106, %v1092, 0
  %v1147 = vsel %vm1106, %v1093, 0
  %v1150 = vsel %vm1106, %v1094, 0
  %v1153 = vsel %vm1106, %v1095, 0
  %1155 = vmatpush.msra.mxu0 0.0
  %1156 = vmatpush.msra.mxu0 0.0
  %1157 = vmatpush.msra.mxu0 0.0
  %1158 = vmatpush.msra.mxu0 0.0
  %1159 = vmatpush.msra.mxu0 0.0
  %1160 = vmatpush.msra.mxu0 0.0
  %1161 = vmatpush.msra.mxu0 0.0
  %1162 = vmatpush.msra.mxu0 0.0
  %1163 = vmatpush.msra.mxu0 0.0
  %1164 = vmatpush.msra.mxu0 0.0
  %1165 = vmatpush.msra.mxu0 0.0
  %1166 = vmatpush.msra.mxu0 0.0
  %1167 = vmatpush.msra.mxu0 0.0
  %1168 = vmatpush.msra.mxu0 0.0
  %1169 = vmatpush.msra.mxu0 0.0
  %1170 = vmatpush.msra.mxu0 %v1101
  %1171 = vmatmul.f32.gmra.mxu0 %v1108
  %v1172 = vpop.f32.mrf.mxu0
  %v1173 = vadd.f32 0.0, %v1172
  %1174 = vmatmul.f32.gmra.mxu0 %v1111
  %v1175 = vpop.f32.mrf.mxu0
  %v1176 = vadd.f32 0.0, %v1175
  %1177 = vmatmul.f32.gmra.mxu0 %v1114
  %v1178 = vpop.f32.mrf.mxu0
  %v1179 = vadd.f32 0.0, %v1178
  %1180 = vmatmul.f32.gmra.mxu0 %v1117
  %v1181 = vpop.f32.mrf.mxu0
  %v1182 = vadd.f32 0.0, %v1181
  %1183 = vmatmul.f32.gmra.mxu0 %v1120
  %v1184 = vpop.f32.mrf.mxu0
  %v1185 = vadd.f32 0.0, %v1184
  %1186 = vmatmul.f32.gmra.mxu0 %v1123
  %v1187 = vpop.f32.mrf.mxu0
  %v1188 = vadd.f32 0.0, %v1187
  %1189 = vmatmul.f32.gmra.mxu0 %v1126
  %v1190 = vpop.f32.mrf.mxu0
  %v1191 = vadd.f32 0.0, %v1190
  %1192 = vmatmul.f32.gmra.mxu0 %v1129
  %v1193 = vpop.f32.mrf.mxu0
  %v1194 = vadd.f32 0.0, %v1193
  %1195 = vmatmul.f32.gmra.mxu0 %v1132
  %v1196 = vpop.f32.mrf.mxu0
  %v1197 = vadd.f32 0.0, %v1196
  %1198 = vmatmul.f32.gmra.mxu0 %v1135
  %v1199 = vpop.f32.mrf.mxu0
  %v1200 = vadd.f32 0.0, %v1199
  %1201 = vmatmul.f32.gmra.mxu0 %v1138
  %v1202 = vpop.f32.mrf.mxu0
  %v1203 = vadd.f32 0.0, %v1202
  %1204 = vmatmul.f32.gmra.mxu0 %v1141
  %v1205 = vpop.f32.mrf.mxu0
  %v1206 = vadd.f32 0.0, %v1205
  %1207 = vmatmul.f32.gmra.mxu0 %v1144
  %v1208 = vpop.f32.mrf.mxu0
  %v1209 = vadd.f32 0.0, %v1208
  %1210 = vmatmul.f32.gmra.mxu0 %v1147
  %v1211 = vpop.f32.mrf.mxu0
  %v1212 = vadd.f32 0.0, %v1211
  %1213 = vmatmul.f32.gmra.mxu0 %v1150
  %v1214 = vpop.f32.mrf.mxu0
  %v1215 = vadd.f32 0.0, %v1214
  %1216 = vmatmul.f32.gmra.mxu0 %v1153
  %v1217 = vpop.f32.mrf.mxu0
  %v1218 = vadd.f32 0.0, %v1217
  %1219 = vdwg.mxu0
  %v1221 = vsel %vm1106, %v1076, 0
  %v1224 = vsel %vm1106, %v1077, 0
  %v1227 = vsel %vm1106, %v1078, 0
  %v1230 = vsel %vm1106, %v1079, 0
  %1232 = vmatpush.msra.mxu0 0.0
  %1233 = vmatpush.msra.mxu0 0.0
  %1234 = vmatpush.msra.mxu0 0.0
  %1235 = vmatpush.msra.mxu0 0.0
  %1236 = vmatpush.msra.mxu0 0.0
  %1237 = vmatpush.msra.mxu0 0.0
  %1238 = vmatpush.msra.mxu0 0.0
  %1239 = vmatpush.msra.mxu0 0.0
  %1240 = vmatpush.msra.mxu0 0.0
  %1241 = vmatpush.msra.mxu0 0.0
  %1242 = vmatpush.msra.mxu0 0.0
  %1243 = vmatpush.msra.mxu0 0.0
  %1244 = vmatpush.msra.mxu0 0.0
  %1245 = vmatpush.msra.mxu0 0.0
  %1246 = vmatpush.msra.mxu0 0.0
  %1247 = vmatpush.msra.mxu0 %v1100
  %1248 = vmatmul.f32.gmra.mxu0 %v1221
  %v1249 = vpop.f32.mrf.mxu0
  %v1250 = vadd.f32 %v1173, %v1249
  %1251 = vmatmul.f32.gmra.mxu0 %v1224
  %v1252 = vpop.f32.mrf.mxu0
  %v1253 = vadd.f32 %v1176, %v1252
  %1254 = vmatmul.f32.gmra.mxu0 %v1227
  %v1255 = vpop.f32.mrf.mxu0
  %v1256 = vadd.f32 %v1179, %v1255
  %1257 = vmatmul.f32.gmra.mxu0 %v1230
  %v1258 = vpop.f32.mrf.mxu0
  %v1259 = vadd.f32 %v1182, %v1258
  %1260 = vmatmul.f32.gmra.mxu0 %v1108
  %v1261 = vpop.f32.mrf.mxu0
  %v1262 = vadd.f32 %v1185, %v1261
  %1263 = vmatmul.f32.gmra.mxu0 %v1111
  %v1264 = vpop.f32.mrf.mxu0
  %v1265 = vadd.f32 %v1188, %v1264
  %1266 = vmatmul.f32.gmra.mxu0 %v1114
  %v1267 = vpop.f32.mrf.mxu0
  %v1268 = vadd.f32 %v1191, %v1267
  %1269 = vmatmul.f32.gmra.mxu0 %v1117
  %v1270 = vpop.f32.mrf.mxu0
  %v1271 = vadd.f32 %v1194, %v1270
  %1272 = vmatmul.f32.gmra.mxu0 %v1120
  %v1273 = vpop.f32.mrf.mxu0
  %v1274 = vadd.f32 %v1197, %v1273
  %1275 = vmatmul.f32.gmra.mxu0 %v1123
  %v1276 = vpop.f32.mrf.mxu0
  %v1277 = vadd.f32 %v1200, %v1276
  %1278 = vmatmul.f32.gmra.mxu0 %v1126
  %v1279 = vpop.f32.mrf.mxu0
  %v1280 = vadd.f32 %v1203, %v1279
  %1281 = vmatmul.f32.gmra.mxu0 %v1129
  %v1282 = vpop.f32.mrf.mxu0
  %v1283 = vadd.f32 %v1206, %v1282
  %1284 = vmatmul.f32.gmra.mxu0 %v1132
  %v1285 = vpop.f32.mrf.mxu0
  %v1286 = vadd.f32 %v1209, %v1285
  %1287 = vmatmul.f32.gmra.mxu0 %v1135
  %v1288 = vpop.f32.mrf.mxu0
  %v1289 = vadd.f32 %v1212, %v1288
  %1290 = vmatmul.f32.gmra.mxu0 %v1138
  %v1291 = vpop.f32.mrf.mxu0
  %v1292 = vadd.f32 %v1215, %v1291
  %1293 = vmatmul.f32.gmra.mxu0 %v1141
  %v1294 = vpop.f32.mrf.mxu0
  %v1295 = vadd.f32 %v1218, %v1294
  %1296 = vdwg.mxu0
  %v1298 = vsel %vm1106, %v1096, 0
  %v1301 = vsel %vm1106, %v1097, 0
  %v1304 = vsel %vm1106, %v1098, 0
  %v1307 = vsel %vm1106, %v1099, 0
  %1309 = vmatpush.msra.mxu0 0.0
  %1310 = vmatpush.msra.mxu0 0.0
  %1311 = vmatpush.msra.mxu0 0.0
  %1312 = vmatpush.msra.mxu0 0.0
  %1313 = vmatpush.msra.mxu0 0.0
  %1314 = vmatpush.msra.mxu0 0.0
  %1315 = vmatpush.msra.mxu0 0.0
  %1316 = vmatpush.msra.mxu0 0.0
  %1317 = vmatpush.msra.mxu0 0.0
  %1318 = vmatpush.msra.mxu0 0.0
  %1319 = vmatpush.msra.mxu0 0.0
  %1320 = vmatpush.msra.mxu0 0.0
  %1321 = vmatpush.msra.mxu0 0.0
  %1322 = vmatpush.msra.mxu0 0.0
  %1323 = vmatpush.msra.mxu0 0.0
  %1324 = vmatpush.msra.mxu0 %v1102
  %1325 = vmatmul.f32.gmra.mxu0 %v1120
  %v1326 = vpop.f32.mrf.mxu0
  %v1327 = vadd.f32 0.0, %v1326
  %1328 = vmatmul.f32.gmra.mxu0 %v1123
  %v1329 = vpop.f32.mrf.mxu0
  %v1330 = vadd.f32 0.0, %v1329
  %1331 = vmatmul.f32.gmra.mxu0 %v1126
  %v1332 = vpop.f32.mrf.mxu0
  %v1333 = vadd.f32 0.0, %v1332
  %1334 = vmatmul.f32.gmra.mxu0 %v1129
  %v1335 = vpop.f32.mrf.mxu0
  %v1336 = vadd.f32 0.0, %v1335
  %1337 = vmatmul.f32.gmra.mxu0 %v1132
  %v1338 = vpop.f32.mrf.mxu0
  %v1339 = vadd.f32 0.0, %v1338
  %1340 = vmatmul.f32.gmra.mxu0 %v1135
  %v1341 = vpop.f32.mrf.mxu0
  %v1342 = vadd.f32 0.0, %v1341
  %1343 = vmatmul.f32.gmra.mxu0 %v1138
  %v1344 = vpop.f32.mrf.mxu0
  %v1345 = vadd.f32 0.0, %v1344
  %1346 = vmatmul.f32.gmra.mxu0 %v1141
  %v1347 = vpop.f32.mrf.mxu0
  %v1348 = vadd.f32 0.0, %v1347
  %1349 = vmatmul.f32.gmra.mxu0 %v1144
  %v1350 = vpop.f32.mrf.mxu0
  %v1351 = vadd.f32 0.0, %v1350
  %1352 = vmatmul.f32.gmra.mxu0 %v1147
  %v1353 = vpop.f32.mrf.mxu0
  %v1354 = vadd.f32 0.0, %v1353
  %1355 = vmatmul.f32.gmra.mxu0 %v1150
  %v1356 = vpop.f32.mrf.mxu0
  %v1357 = vadd.f32 0.0, %v1356
  %1358 = vmatmul.f32.gmra.mxu0 %v1153
  %v1359 = vpop.f32.mrf.mxu0
  %v1360 = vadd.f32 0.0, %v1359
  %1361 = vmatmul.f32.gmra.mxu0 %v1298
  %v1362 = vpop.f32.mrf.mxu0
  %v1363 = vadd.f32 0.0, %v1362
  %1364 = vmatmul.f32.gmra.mxu0 %v1301
  %v1365 = vpop.f32.mrf.mxu0
  %v1366 = vadd.f32 0.0, %v1365
  %1367 = vmatmul.f32.gmra.mxu0 %v1304
  %v1368 = vpop.f32.mrf.mxu0
  %v1369 = vadd.f32 0.0, %v1368
  %1370 = vmatmul.f32.gmra.mxu0 %v1307
  %v1371 = vpop.f32.mrf.mxu0
  %v1372 = vadd.f32 0.0, %v1371
  %1373 = vdwg.mxu0
  %v1374 = vadd.f32 %v1250, %v1327
  %v1375 = vadd.f32 %v1253, %v1330
  %v1376 = vadd.f32 %v1256, %v1333
  %v1377 = vadd.f32 %v1259, %v1336
  %v1378 = vadd.f32 %v1262, %v1339
  %v1379 = vadd.f32 %v1265, %v1342
  %v1380 = vadd.f32 %v1268, %v1345
  %v1381 = vadd.f32 %v1271, %v1348
  %v1382 = vadd.f32 %v1274, %v1351
  %v1383 = vadd.f32 %v1277, %v1354
  %v1384 = vadd.f32 %v1280, %v1357
  %v1385 = vadd.f32 %v1283, %v1360
  %v1386 = vadd.f32 %v1286, %v1363
  %v1387 = vadd.f32 %v1289, %v1366
  %v1388 = vadd.f32 %v1292, %v1369
  %v1389 = vadd.f32 %v1295, %v1372
  %v1391 = vperm.slane %v1103, 0
  %v1393 = vadd.f32 %v1374, %v1391
  %v1394 = vadd.f32 %v1375, %v1391
  %v1395 = vadd.f32 %v1376, %v1391
  %v1396 = vadd.f32 %v1377, %v1391
  %v1397 = vadd.f32 %v1378, %v1391
  %v1398 = vadd.f32 %v1379, %v1391
  %v1399 = vadd.f32 %v1380, %v1391
  %v1400 = vadd.f32 %v1381, %v1391
  %v1401 = vadd.f32 %v1382, %v1391
  %v1402 = vadd.f32 %v1383, %v1391
  %v1403 = vadd.f32 %v1384, %v1391
  %v1404 = vadd.f32 %v1385, %v1391
  %v1405 = vadd.f32 %v1386, %v1391
  %v1406 = vadd.f32 %v1387, %v1391
  %v1407 = vadd.f32 %v1388, %v1391
  %v1408 = vadd.f32 %v1389, %v1391
  %v1409 = vsub.f32 0.0, %v1393
  %v1410 = vsub.f32 0.0, %v1394
  %v1411 = vsub.f32 0.0, %v1395
  %v1412 = vsub.f32 0.0, %v1396
  %v1413 = vsub.f32 0.0, %v1397
  %v1414 = vsub.f32 0.0, %v1398
  %v1415 = vsub.f32 0.0, %v1399
  %v1416 = vsub.f32 0.0, %v1400
  %v1417 = vsub.f32 0.0, %v1401
  %v1418 = vsub.f32 0.0, %v1402
  %v1419 = vsub.f32 0.0, %v1403
  %v1420 = vsub.f32 0.0, %v1404
  %v1421 = vsub.f32 0.0, %v1405
  %v1422 = vsub.f32 0.0, %v1406
  %v1423 = vsub.f32 0.0, %v1407
  %v1424 = vsub.f32 0.0, %v1408
  %v1425 = vmul.f32 %v1409, 1.442695
  %v1426 = vpow.pop %v1425
  %v1427 = vmul.f32 %v1410, 1.442695
  %v1428 = vpow.pop %v1427
  %v1429 = vmul.f32 %v1411, 1.442695
  %v1430 = vpow.pop %v1429
  %v1431 = vmul.f32 %v1412, 1.442695
  %v1432 = vpow.pop %v1431
  %v1433 = vmul.f32 %v1413, 1.442695
  %v1434 = vpow.pop %v1433
  %v1435 = vmul.f32 %v1414, 1.442695
  %v1436 = vpow.pop %v1435
  %v1437 = vmul.f32 %v1415, 1.442695
  %v1438 = vpow.pop %v1437
  %v1439 = vmul.f32 %v1416, 1.442695
  %v1440 = vpow.pop %v1439
  %v1441 = vmul.f32 %v1417, 1.442695
  %v1442 = vpow.pop %v1441
  %v1443 = vmul.f32 %v1418, 1.442695
  %v1444 = vpow.pop %v1443
  %v1445 = vmul.f32 %v1419, 1.442695
  %v1446 = vpow.pop %v1445
  %v1447 = vmul.f32 %v1420, 1.442695
  %v1448 = vpow.pop %v1447
  %v1449 = vmul.f32 %v1421, 1.442695
  %v1450 = vpow.pop %v1449
  %v1451 = vmul.f32 %v1422, 1.442695
  %v1452 = vpow.pop %v1451
  %v1453 = vmul.f32 %v1423, 1.442695
  %v1454 = vpow.pop %v1453
  %v1455 = vmul.f32 %v1424, 1.442695
  %v1456 = vpow.pop %v1455
  %v1457 = vadd.f32 %v1426, 1.0
  %v1458 = vadd.f32 %v1428, 1.0
  %v1459 = vadd.f32 %v1430, 1.0
  %v1460 = vadd.f32 %v1432, 1.0
  %v1461 = vadd.f32 %v1434, 1.0
  %v1462 = vadd.f32 %v1436, 1.0
  %v1463 = vadd.f32 %v1438, 1.0
  %v1464 = vadd.f32 %v1440, 1.0
  %v1465 = vadd.f32 %v1442, 1.0
  %v1466 = vadd.f32 %v1444, 1.0
  %v1467 = vadd.f32 %v1446, 1.0
  %v1468 = vadd.f32 %v1448, 1.0
  %v1469 = vadd.f32 %v1450, 1.0
  %v1470 = vadd.f32 %v1452, 1.0
  %v1471 = vadd.f32 %v1454, 1.0
  %v1472 = vadd.f32 %v1456, 1.0
  %v1473 = vrcp.pop %v1457
  %v1474 = vrcp.pop %v1458
  %v1475 = vrcp.pop %v1459
  %v1476 = vrcp.pop %v1460
  %v1477 = vrcp.pop %v1461
  %v1478 = vrcp.pop %v1462
  %v1479 = vrcp.pop %v1463
  %v1480 = vrcp.pop %v1464
  %v1481 = vrcp.pop %v1465
  %v1482 = vrcp.pop %v1466
  %v1483 = vrcp.pop %v1467
  %v1484 = vrcp.pop %v1468
  %v1485 = vrcp.pop %v1469
  %v1486 = vrcp.pop %v1470
  %v1487 = vrcp.pop %v1471
  %v1488 = vrcp.pop %v1472
  %1505 = vrot.lane.b32.xlu0 %v1473, 120
  %v1506 = vpop.permute.xlu0 %1505
  %1507 = vrot.lane.b32.xlu0 %v1474, 120
  %v1508 = vpop.permute.xlu0 %1507
  %1509 = vrot.lane.b32.xlu0 %v1475, 120
  %v1510 = vpop.permute.xlu0 %1509
  %1511 = vrot.lane.b32.xlu0 %v1476, 120
  %v1512 = vpop.permute.xlu0 %1511
  %1513 = vrot.lane.b32.xlu0 %v1477, 120
  %v1514 = vpop.permute.xlu0 %1513
  %1515 = vrot.lane.b32.xlu0 %v1478, 120
  %v1516 = vpop.permute.xlu0 %1515
  %1517 = vrot.lane.b32.xlu0 %v1479, 120
  %v1518 = vpop.permute.xlu0 %1517
  %1519 = vrot.lane.b32.xlu0 %v1480, 120
  %v1520 = vpop.permute.xlu0 %1519
  %1521 = vrot.lane.b32.xlu0 %v1481, 120
  %v1522 = vpop.permute.xlu0 %1521
  %1523 = vrot.lane.b32.xlu0 %v1482, 120
  %v1524 = vpop.permute.xlu0 %1523
  %1525 = vrot.lane.b32.xlu0 %v1483, 120
  %v1526 = vpop.permute.xlu0 %1525
  %1527 = vrot.lane.b32.xlu0 %v1484, 120
  %v1528 = vpop.permute.xlu0 %1527
  %1529 = vrot.lane.b32.xlu0 %v1485, 120
  %v1530 = vpop.permute.xlu0 %1529
  %1531 = vrot.lane.b32.xlu0 %v1486, 120
  %v1532 = vpop.permute.xlu0 %1531
  %1533 = vrot.lane.b32.xlu0 %v1487, 120
  %v1534 = vpop.permute.xlu0 %1533
  %1535 = vrot.lane.b32.xlu0 %v1488, 120
  %v1536 = vpop.permute.xlu0 %1535
  %v1553 = vadd.f32 %v1393, %v1506
  %v1554 = vadd.f32 %v1394, %v1508
  %v1555 = vadd.f32 %v1395, %v1510
  %v1556 = vadd.f32 %v1396, %v1512
  %v1557 = vadd.f32 %v1397, %v1514
  %v1558 = vadd.f32 %v1398, %v1516
  %v1559 = vadd.f32 %v1399, %v1518
  %v1560 = vadd.f32 %v1400, %v1520
  %v1561 = vadd.f32 %v1401, %v1522
  %v1562 = vadd.f32 %v1402, %v1524
  %v1563 = vadd.f32 %v1403, %v1526
  %v1564 = vadd.f32 %v1404, %v1528
  %v1565 = vadd.f32 %v1405, %v1530
  %v1566 = vadd.f32 %v1406, %v1532
  %v1567 = vadd.f32 %v1407, %v1534
  %v1568 = vadd.f32 %v1408, %v1536
  %1585 = vrot.lane.b32.xlu0 %v1393, 112
  %v1586 = vpop.permute.xlu0 %1585
  %1587 = vrot.lane.b32.xlu0 %v1394, 112
  %v1588 = vpop.permute.xlu0 %1587
  %1589 = vrot.lane.b32.xlu0 %v1395, 112
  %v1590 = vpop.permute.xlu0 %1589
  %1591 = vrot.lane.b32.xlu0 %v1396, 112
  %v1592 = vpop.permute.xlu0 %1591
  %1593 = vrot.lane.b32.xlu0 %v1397, 112
  %v1594 = vpop.permute.xlu0 %1593
  %1595 = vrot.lane.b32.xlu0 %v1398, 112
  %v1596 = vpop.permute.xlu0 %1595
  %1597 = vrot.lane.b32.xlu0 %v1399, 112
  %v1598 = vpop.permute.xlu0 %1597
  %1599 = vrot.lane.b32.xlu0 %v1400, 112
  %v1600 = vpop.permute.xlu0 %1599
  %1601 = vrot.lane.b32.xlu0 %v1401, 112
  %v1602 = vpop.permute.xlu0 %1601
  %1603 = vrot.lane.b32.xlu0 %v1402, 112
  %v1604 = vpop.permute.xlu0 %1603
  %1605 = vrot.lane.b32.xlu0 %v1403, 112
  %v1606 = vpop.permute.xlu0 %1605
  %1607 = vrot.lane.b32.xlu0 %v1404, 112
  %v1608 = vpop.permute.xlu0 %1607
  %1609 = vrot.lane.b32.xlu0 %v1405, 112
  %v1610 = vpop.permute.xlu0 %1609
  %1611 = vrot.lane.b32.xlu0 %v1406, 112
  %v1612 = vpop.permute.xlu0 %1611
  %1613 = vrot.lane.b32.xlu0 %v1407, 112
  %v1614 = vpop.permute.xlu0 %1613
  %1615 = vrot.lane.b32.xlu0 %v1408, 112
  %v1616 = vpop.permute.xlu0 %1615
  %v1633 = vadd.f32 %v1553, %v1586
  %v1634 = vadd.f32 %v1554, %v1588
  %v1635 = vadd.f32 %v1555, %v1590
  %v1636 = vadd.f32 %v1556, %v1592
  %v1637 = vadd.f32 %v1557, %v1594
  %v1638 = vadd.f32 %v1558, %v1596
  %v1639 = vadd.f32 %v1559, %v1598
  %v1640 = vadd.f32 %v1560, %v1600
  %v1641 = vadd.f32 %v1561, %v1602
  %v1642 = vadd.f32 %v1562, %v1604
  %v1643 = vadd.f32 %v1563, %v1606
  %v1644 = vadd.f32 %v1564, %v1608
  %v1645 = vadd.f32 %v1565, %v1610
  %v1646 = vadd.f32 %v1566, %v1612
  %v1647 = vadd.f32 %v1567, %v1614
  %v1648 = vadd.f32 %v1568, %v1616
  %v1649 = vmax.f32 %v1633, 0.0
  %v1650 = vmax.f32 %v1634, 0.0
  %v1651 = vmax.f32 %v1635, 0.0
  %v1652 = vmax.f32 %v1636, 0.0
  %v1653 = vmax.f32 %v1637, 0.0
  %v1654 = vmax.f32 %v1638, 0.0
  %v1655 = vmax.f32 %v1639, 0.0
  %v1656 = vmax.f32 %v1640, 0.0
  %v1657 = vmax.f32 %v1641, 0.0
  %v1658 = vmax.f32 %v1642, 0.0
  %v1659 = vmax.f32 %v1643, 0.0
  %v1660 = vmax.f32 %v1644, 0.0
  %v1661 = vmax.f32 %v1645, 0.0
  %v1662 = vmax.f32 %v1646, 0.0
  %v1663 = vmax.f32 %v1647, 0.0
  %v1664 = vmax.f32 %v1648, 0.0
  %v1666 = vperm.slane %v1104, 0
  %v1668 = vmul.f32 %v1649, %v1666
  %v1669 = vmul.f32 %v1650, %v1666
  %v1670 = vmul.f32 %v1651, %v1666
  %v1671 = vmul.f32 %v1652, %v1666
  %v1672 = vmul.f32 %v1653, %v1666
  %v1673 = vmul.f32 %v1654, %v1666
  %v1674 = vmul.f32 %v1655, %v1666
  %v1675 = vmul.f32 %v1656, %v1666
  %v1676 = vmul.f32 %v1657, %v1666
  %v1677 = vmul.f32 %v1658, %v1666
  %v1678 = vmul.f32 %v1659, %v1666
  %v1679 = vmul.f32 %v1660, %v1666
  %v1680 = vmul.f32 %v1661, %v1666
  %v1681 = vmul.f32 %v1662, %v1666
  %v1682 = vmul.f32 %v1663, %v1666
  %v1683 = vmul.f32 %v1664, %v1666
  %v1685 = vperm.slane %v1105, 0
  %v1687 = vadd.f32 %v1668, %v1685
  %v1688 = vadd.f32 %v1669, %v1685
  %v1689 = vadd.f32 %v1670, %v1685
  %v1690 = vadd.f32 %v1671, %v1685
  %v1691 = vadd.f32 %v1672, %v1685
  %v1692 = vadd.f32 %v1673, %v1685
  %v1693 = vadd.f32 %v1674, %v1685
  %v1694 = vadd.f32 %v1675, %v1685
  %v1695 = vadd.f32 %v1676, %v1685
  %v1696 = vadd.f32 %v1677, %v1685
  %v1697 = vadd.f32 %v1678, %v1685
  %v1698 = vadd.f32 %v1679, %v1685
  %v1699 = vadd.f32 %v1680, %v1685
  %v1700 = vadd.f32 %v1681, %v1685
  %v1701 = vadd.f32 %v1682, %v1685
  %v1702 = vadd.f32 %v1683, %v1685
  %v1703 = vadd.f32 %v1687, %v1084
  %v1704 = vadd.f32 %v1688, %v1085
  %v1705 = vadd.f32 %v1689, %v1086
  %v1706 = vadd.f32 %v1690, %v1087
  %v1707 = vadd.f32 %v1691, %v1088
  %v1708 = vadd.f32 %v1692, %v1089
  %v1709 = vadd.f32 %v1693, %v1090
  %v1710 = vadd.f32 %v1694, %v1091
  %v1711 = vadd.f32 %v1695, %v1092
  %v1712 = vadd.f32 %v1696, %v1093
  %v1713 = vadd.f32 %v1697, %v1094
  %v1714 = vadd.f32 %v1698, %v1095
  %v1715 = vadd.f32 %v1699, %v1096
  %v1716 = vadd.f32 %v1700, %v1097
  %v1717 = vadd.f32 %v1701, %v1098
  %v1718 = vadd.f32 %v1702, %v1099
  %v1719 = vld [vmem:[%s11] sm:$0xff]
  %v1720 = vld [vmem:[%s11 + $0x8] sm:$0xff]
  %v1721 = vld [vmem:[%s11 + $0x10] sm:$0xff]
  %v1722 = vld [vmem:[%s12] sm:$0x1]
  %v1723 = vld [vmem:[%s13] sm:$0x1]
  %v1724 = vld [vmem:[%s14] sm:$0x1]
  %v1726 = vsel %vm1106, %v1707, 0
  %v1729 = vsel %vm1106, %v1708, 0
  %v1732 = vsel %vm1106, %v1709, 0
  %v1735 = vsel %vm1106, %v1710, 0
  %v1738 = vsel %vm1106, %v1711, 0
  %v1741 = vsel %vm1106, %v1712, 0
  %v1744 = vsel %vm1106, %v1713, 0
  %v1747 = vsel %vm1106, %v1714, 0
  %1749 = vmatpush.msra.mxu0 0.0
  %1750 = vmatpush.msra.mxu0 0.0
  %1751 = vmatpush.msra.mxu0 0.0
  %1752 = vmatpush.msra.mxu0 0.0
  %1753 = vmatpush.msra.mxu0 0.0
  %1754 = vmatpush.msra.mxu0 0.0
  %1755 = vmatpush.msra.mxu0 0.0
  %1756 = vmatpush.msra.mxu0 0.0
  %1757 = vmatpush.msra.mxu0 0.0
  %1758 = vmatpush.msra.mxu0 0.0
  %1759 = vmatpush.msra.mxu0 0.0
  %1760 = vmatpush.msra.mxu0 0.0
  %1761 = vmatpush.msra.mxu0 0.0
  %1762 = vmatpush.msra.mxu0 0.0
  %1763 = vmatpush.msra.mxu0 0.0
  %1764 = vmatpush.msra.mxu0 %v1720
  %1765 = vmatmul.f32.gmra.mxu0 %v1726
  %v1766 = vpop.f32.mrf.mxu0
  %v1767 = vadd.f32 0.0, %v1766
  %1768 = vmatmul.f32.gmra.mxu0 %v1729
  %v1769 = vpop.f32.mrf.mxu0
  %v1770 = vadd.f32 0.0, %v1769
  %1771 = vmatmul.f32.gmra.mxu0 %v1732
  %v1772 = vpop.f32.mrf.mxu0
  %v1773 = vadd.f32 0.0, %v1772
  %1774 = vmatmul.f32.gmra.mxu0 %v1735
  %v1775 = vpop.f32.mrf.mxu0
  %v1776 = vadd.f32 0.0, %v1775
  %1777 = vmatmul.f32.gmra.mxu0 %v1738
  %v1778 = vpop.f32.mrf.mxu0
  %v1779 = vadd.f32 0.0, %v1778
  %1780 = vmatmul.f32.gmra.mxu0 %v1741
  %v1781 = vpop.f32.mrf.mxu0
  %v1782 = vadd.f32 0.0, %v1781
  %1783 = vmatmul.f32.gmra.mxu0 %v1744
  %v1784 = vpop.f32.mrf.mxu0
  %v1785 = vadd.f32 0.0, %v1784
  %1786 = vmatmul.f32.gmra.mxu0 %v1747
  %v1787 = vpop.f32.mrf.mxu0
  %v1788 = vadd.f32 0.0, %v1787
  %1789 = vdwg.mxu0
  %v1791 = vsel %vm1106, %v1703, 0
  %v1794 = vsel %vm1106, %v1704, 0
  %v1797 = vsel %vm1106, %v1705, 0
  %v1800 = vsel %vm1106, %v1706, 0
  %1802 = vmatpush.msra.mxu0 0.0
  %1803 = vmatpush.msra.mxu0 0.0
  %1804 = vmatpush.msra.mxu0 0.0
  %1805 = vmatpush.msra.mxu0 0.0
  %1806 = vmatpush.msra.mxu0 0.0
  %1807 = vmatpush.msra.mxu0 0.0
  %1808 = vmatpush.msra.mxu0 0.0
  %1809 = vmatpush.msra.mxu0 0.0
  %1810 = vmatpush.msra.mxu0 0.0
  %1811 = vmatpush.msra.mxu0 0.0
  %1812 = vmatpush.msra.mxu0 0.0
  %1813 = vmatpush.msra.mxu0 0.0
  %1814 = vmatpush.msra.mxu0 0.0
  %1815 = vmatpush.msra.mxu0 0.0
  %1816 = vmatpush.msra.mxu0 0.0
  %1817 = vmatpush.msra.mxu0 %v1719
  %1818 = vmatmul.f32.gmra.mxu0 %v1791
  %v1819 = vpop.f32.mrf.mxu0
  %v1820 = vadd.f32 %v1767, %v1819
  %1821 = vmatmul.f32.gmra.mxu0 %v1794
  %v1822 = vpop.f32.mrf.mxu0
  %v1823 = vadd.f32 %v1770, %v1822
  %1824 = vmatmul.f32.gmra.mxu0 %v1797
  %v1825 = vpop.f32.mrf.mxu0
  %v1826 = vadd.f32 %v1773, %v1825
  %1827 = vmatmul.f32.gmra.mxu0 %v1800
  %v1828 = vpop.f32.mrf.mxu0
  %v1829 = vadd.f32 %v1776, %v1828
  %1830 = vmatmul.f32.gmra.mxu0 %v1726
  %v1831 = vpop.f32.mrf.mxu0
  %v1832 = vadd.f32 %v1779, %v1831
  %1833 = vmatmul.f32.gmra.mxu0 %v1729
  %v1834 = vpop.f32.mrf.mxu0
  %v1835 = vadd.f32 %v1782, %v1834
  %1836 = vmatmul.f32.gmra.mxu0 %v1732
  %v1837 = vpop.f32.mrf.mxu0
  %v1838 = vadd.f32 %v1785, %v1837
  %1839 = vmatmul.f32.gmra.mxu0 %v1735
  %v1840 = vpop.f32.mrf.mxu0
  %v1841 = vadd.f32 %v1788, %v1840
  %1842 = vdwg.mxu0
  %v1844 = vsel %vm1106, %v1715, 0
  %v1847 = vsel %vm1106, %v1716, 0
  %v1850 = vsel %vm1106, %v1717, 0
  %v1853 = vsel %vm1106, %v1718, 0
  %1855 = vmatpush.msra.mxu0 0.0
  %1856 = vmatpush.msra.mxu0 0.0
  %1857 = vmatpush.msra.mxu0 0.0
  %1858 = vmatpush.msra.mxu0 0.0
  %1859 = vmatpush.msra.mxu0 0.0
  %1860 = vmatpush.msra.mxu0 0.0
  %1861 = vmatpush.msra.mxu0 0.0
  %1862 = vmatpush.msra.mxu0 0.0
  %1863 = vmatpush.msra.mxu0 0.0
  %1864 = vmatpush.msra.mxu0 0.0
  %1865 = vmatpush.msra.mxu0 0.0
  %1866 = vmatpush.msra.mxu0 0.0
  %1867 = vmatpush.msra.mxu0 0.0
  %1868 = vmatpush.msra.mxu0 0.0
  %1869 = vmatpush.msra.mxu0 0.0
  %1870 = vmatpush.msra.mxu0 %v1721
  %1871 = vmatmul.f32.gmra.mxu0 %v1738
  %v1872 = vpop.f32.mrf.mxu0
  %v1873 = vadd.f32 0.0, %v1872
  %1874 = vmatmul.f32.gmra.mxu0 %v1741
  %v1875 = vpop.f32.mrf.mxu0
  %v1876 = vadd.f32 0.0, %v1875
  %1877 = vmatmul.f32.gmra.mxu0 %v1744
  %v1878 = vpop.f32.mrf.mxu0
  %v1879 = vadd.f32 0.0, %v1878
  %1880 = vmatmul.f32.gmra.mxu0 %v1747
  %v1881 = vpop.f32.mrf.mxu0
  %v1882 = vadd.f32 0.0, %v1881
  %1883 = vmatmul.f32.gmra.mxu0 %v1844
  %v1884 = vpop.f32.mrf.mxu0
  %v1885 = vadd.f32 0.0, %v1884
  %1886 = vmatmul.f32.gmra.mxu0 %v1847
  %v1887 = vpop.f32.mrf.mxu0
  %v1888 = vadd.f32 0.0, %v1887
  %1889 = vmatmul.f32.gmra.mxu0 %v1850
  %v1890 = vpop.f32.mrf.mxu0
  %v1891 = vadd.f32 0.0, %v1890
  %1892 = vmatmul.f32.gmra.mxu0 %v1853
  %v1893 = vpop.f32.mrf.mxu0
  %v1894 = vadd.f32 0.0, %v1893
  %1895 = vdwg.mxu0
  %v1896 = vadd.f32 %v1820, %v1873
  %v1897 = vadd.f32 %v1823, %v1876
  %v1898 = vadd.f32 %v1826, %v1879
  %v1899 = vadd.f32 %v1829, %v1882
  %v1900 = vadd.f32 %v1832, %v1885
  %v1901 = vadd.f32 %v1835, %v1888
  %v1902 = vadd.f32 %v1838, %v1891
  %v1903 = vadd.f32 %v1841, %v1894
  %v1905 = vperm.slane %v1722, 0
  %v1907 = vadd.f32 %v1896, %v1905
  %v1908 = vadd.f32 %v1897, %v1905
  %v1909 = vadd.f32 %v1898, %v1905
  %v1910 = vadd.f32 %v1899, %v1905
  %v1911 = vadd.f32 %v1900, %v1905
  %v1912 = vadd.f32 %v1901, %v1905
  %v1913 = vadd.f32 %v1902, %v1905
  %v1914 = vadd.f32 %v1903, %v1905
  %v1915 = vsub.f32 0.0, %v1907
  %v1916 = vsub.f32 0.0, %v1908
  %v1917 = vsub.f32 0.0, %v1909
  %v1918 = vsub.f32 0.0, %v1910
  %v1919 = vsub.f32 0.0, %v1911
  %v1920 = vsub.f32 0.0, %v1912
  %v1921 = vsub.f32 0.0, %v1913
  %v1922 = vsub.f32 0.0, %v1914
  %v1923 = vmul.f32 %v1915, 1.442695
  %v1924 = vpow.pop %v1923
  %v1925 = vmul.f32 %v1916, 1.442695
  %v1926 = vpow.pop %v1925
  %v1927 = vmul.f32 %v1917, 1.442695
  %v1928 = vpow.pop %v1927
  %v1929 = vmul.f32 %v1918, 1.442695
  %v1930 = vpow.pop %v1929
  %v1931 = vmul.f32 %v1919, 1.442695
  %v1932 = vpow.pop %v1931
  %v1933 = vmul.f32 %v1920, 1.442695
  %v1934 = vpow.pop %v1933
  %v1935 = vmul.f32 %v1921, 1.442695
  %v1936 = vpow.pop %v1935
  %v1937 = vmul.f32 %v1922, 1.442695
  %v1938 = vpow.pop %v1937
  %v1939 = vadd.f32 %v1924, 1.0
  %v1940 = vadd.f32 %v1926, 1.0
  %v1941 = vadd.f32 %v1928, 1.0
  %v1942 = vadd.f32 %v1930, 1.0
  %v1943 = vadd.f32 %v1932, 1.0
  %v1944 = vadd.f32 %v1934, 1.0
  %v1945 = vadd.f32 %v1936, 1.0
  %v1946 = vadd.f32 %v1938, 1.0
  %v1947 = vrcp.pop %v1939
  %v1948 = vrcp.pop %v1940
  %v1949 = vrcp.pop %v1941
  %v1950 = vrcp.pop %v1942
  %v1951 = vrcp.pop %v1943
  %v1952 = vrcp.pop %v1944
  %v1953 = vrcp.pop %v1945
  %v1954 = vrcp.pop %v1946
  %1963 = vrot.lane.b32.xlu0 %v1947, 120
  %v1964 = vpop.permute.xlu0 %1963
  %1965 = vrot.lane.b32.xlu0 %v1948, 120
  %v1966 = vpop.permute.xlu0 %1965
  %1967 = vrot.lane.b32.xlu0 %v1949, 120
  %v1968 = vpop.permute.xlu0 %1967
  %1969 = vrot.lane.b32.xlu0 %v1950, 120
  %v1970 = vpop.permute.xlu0 %1969
  %1971 = vrot.lane.b32.xlu0 %v1951, 120
  %v1972 = vpop.permute.xlu0 %1971
  %1973 = vrot.lane.b32.xlu0 %v1952, 120
  %v1974 = vpop.permute.xlu0 %1973
  %1975 = vrot.lane.b32.xlu0 %v1953, 120
  %v1976 = vpop.permute.xlu0 %1975
  %1977 = vrot.lane.b32.xlu0 %v1954, 120
  %v1978 = vpop.permute.xlu0 %1977
  %v1987 = vadd.f32 %v1907, %v1964
  %v1988 = vadd.f32 %v1908, %v1966
  %v1989 = vadd.f32 %v1909, %v1968
  %v1990 = vadd.f32 %v1910, %v1970
  %v1991 = vadd.f32 %v1911, %v1972
  %v1992 = vadd.f32 %v1912, %v1974
  %v1993 = vadd.f32 %v1913, %v1976
  %v1994 = vadd.f32 %v1914, %v1978
  %2003 = vrot.lane.b32.xlu0 %v1907, 112
  %v2004 = vpop.permute.xlu0 %2003
  %2005 = vrot.lane.b32.xlu0 %v1908, 112
  %v2006 = vpop.permute.xlu0 %2005
  %2007 = vrot.lane.b32.xlu0 %v1909, 112
  %v2008 = vpop.permute.xlu0 %2007
  %2009 = vrot.lane.b32.xlu0 %v1910, 112
  %v2010 = vpop.permute.xlu0 %2009
  %2011 = vrot.lane.b32.xlu0 %v1911, 112
  %v2012 = vpop.permute.xlu0 %2011
  %2013 = vrot.lane.b32.xlu0 %v1912, 112
  %v2014 = vpop.permute.xlu0 %2013
  %2015 = vrot.lane.b32.xlu0 %v1913, 112
  %v2016 = vpop.permute.xlu0 %2015
  %2017 = vrot.lane.b32.xlu0 %v1914, 112
  %v2018 = vpop.permute.xlu0 %2017
  %v2027 = vadd.f32 %v1987, %v2004
  %v2028 = vadd.f32 %v1988, %v2006
  %v2029 = vadd.f32 %v1989, %v2008
  %v2030 = vadd.f32 %v1990, %v2010
  %v2031 = vadd.f32 %v1991, %v2012
  %v2032 = vadd.f32 %v1992, %v2014
  %v2033 = vadd.f32 %v1993, %v2016
  %v2034 = vadd.f32 %v1994, %v2018
  %v2035 = vmax.f32 %v2027, 0.0
  %v2036 = vmax.f32 %v2028, 0.0
  %v2037 = vmax.f32 %v2029, 0.0
  %v2038 = vmax.f32 %v2030, 0.0
  %v2039 = vmax.f32 %v2031, 0.0
  %v2040 = vmax.f32 %v2032, 0.0
  %v2041 = vmax.f32 %v2033, 0.0
  %v2042 = vmax.f32 %v2034, 0.0
  %v2044 = vperm.slane %v1723, 0
  %v2046 = vmul.f32 %v2035, %v2044
  %v2047 = vmul.f32 %v2036, %v2044
  %v2048 = vmul.f32 %v2037, %v2044
  %v2049 = vmul.f32 %v2038, %v2044
  %v2050 = vmul.f32 %v2039, %v2044
  %v2051 = vmul.f32 %v2040, %v2044
  %v2052 = vmul.f32 %v2041, %v2044
  %v2053 = vmul.f32 %v2042, %v2044
  %v2055 = vperm.slane %v1724, 0
  %v2057 = vadd.f32 %v2046, %v2055
  %v2058 = vadd.f32 %v2047, %v2055
  %v2059 = vadd.f32 %v2048, %v2055
  %v2060 = vadd.f32 %v2049, %v2055
  %v2061 = vadd.f32 %v2050, %v2055
  %v2062 = vadd.f32 %v2051, %v2055
  %v2063 = vadd.f32 %v2052, %v2055
  %v2064 = vadd.f32 %v2053, %v2055
  %v2065 = vadd.f32 %v2057, %v1711
  %v2066 = vadd.f32 %v2058, %v1712
  %v2067 = vadd.f32 %v2059, %v1713
  %v2068 = vadd.f32 %v2060, %v1714
  %v2069 = vadd.f32 %v2061, %v1715
  %v2070 = vadd.f32 %v2062, %v1716
  %v2071 = vadd.f32 %v2063, %v1717
  %v2072 = vadd.f32 %v2064, %v1718
  %v2073 = vld [vmem:[%s15] sm:$0xff]
  %v2074 = vld [vmem:[%s15 + $0x8] sm:$0xff]
  %v2075 = vld [vmem:[%s16] sm:$0x1]
  %v2076 = vld [vmem:[%s17] sm:$0x1]
  %v2077 = vld [vmem:[%s18] sm:$0x1]
  %v2079 = vsel %vm1106, %v2069, 0
  %v2082 = vsel %vm1106, %v2070, 0
  %v2085 = vsel %vm1106, %v2071, 0
  %v2088 = vsel %vm1106, %v2072, 0
  %2090 = vmatpush.msra.mxu0 0.0
  %2091 = vmatpush.msra.mxu0 0.0
  %2092 = vmatpush.msra.mxu0 0.0
  %2093 = vmatpush.msra.mxu0 0.0
  %2094 = vmatpush.msra.mxu0 0.0
  %2095 = vmatpush.msra.mxu0 0.0
  %2096 = vmatpush.msra.mxu0 0.0
  %2097 = vmatpush.msra.mxu0 0.0
  %2098 = vmatpush.msra.mxu0 0.0
  %2099 = vmatpush.msra.mxu0 0.0
  %2100 = vmatpush.msra.mxu0 0.0
  %2101 = vmatpush.msra.mxu0 0.0
  %2102 = vmatpush.msra.mxu0 0.0
  %2103 = vmatpush.msra.mxu0 0.0
  %2104 = vmatpush.msra.mxu0 0.0
  %2105 = vmatpush.msra.mxu0 %v2074
  %2106 = vmatmul.f32.gmra.mxu0 %v2079
  %v2107 = vpop.f32.mrf.mxu0
  %v2108 = vadd.f32 0.0, %v2107
  %2109 = vmatmul.f32.gmra.mxu0 %v2082
  %v2110 = vpop.f32.mrf.mxu0
  %v2111 = vadd.f32 0.0, %v2110
  %2112 = vmatmul.f32.gmra.mxu0 %v2085
  %v2113 = vpop.f32.mrf.mxu0
  %v2114 = vadd.f32 0.0, %v2113
  %2115 = vmatmul.f32.gmra.mxu0 %v2088
  %v2116 = vpop.f32.mrf.mxu0
  %v2117 = vadd.f32 0.0, %v2116
  %2118 = vdwg.mxu0
  %v2120 = vsel %vm1106, %v2065, 0
  %v2123 = vsel %vm1106, %v2066, 0
  %v2126 = vsel %vm1106, %v2067, 0
  %v2129 = vsel %vm1106, %v2068, 0
  %2131 = vmatpush.msra.mxu0 0.0
  %2132 = vmatpush.msra.mxu0 0.0
  %2133 = vmatpush.msra.mxu0 0.0
  %2134 = vmatpush.msra.mxu0 0.0
  %2135 = vmatpush.msra.mxu0 0.0
  %2136 = vmatpush.msra.mxu0 0.0
  %2137 = vmatpush.msra.mxu0 0.0
  %2138 = vmatpush.msra.mxu0 0.0
  %2139 = vmatpush.msra.mxu0 0.0
  %2140 = vmatpush.msra.mxu0 0.0
  %2141 = vmatpush.msra.mxu0 0.0
  %2142 = vmatpush.msra.mxu0 0.0
  %2143 = vmatpush.msra.mxu0 0.0
  %2144 = vmatpush.msra.mxu0 0.0
  %2145 = vmatpush.msra.mxu0 0.0
  %2146 = vmatpush.msra.mxu0 %v2073
  %2147 = vmatmul.f32.gmra.mxu0 %v2120
  %v2148 = vpop.f32.mrf.mxu0
  %v2149 = vadd.f32 %v2108, %v2148
  %2150 = vmatmul.f32.gmra.mxu0 %v2123
  %v2151 = vpop.f32.mrf.mxu0
  %v2152 = vadd.f32 %v2111, %v2151
  %2153 = vmatmul.f32.gmra.mxu0 %v2126
  %v2154 = vpop.f32.mrf.mxu0
  %v2155 = vadd.f32 %v2114, %v2154
  %2156 = vmatmul.f32.gmra.mxu0 %v2129
  %v2157 = vpop.f32.mrf.mxu0
  %v2158 = vadd.f32 %v2117, %v2157
  %2159 = vdwg.mxu0
  %v2161 = vperm.slane %v2075, 0
  %v2163 = vadd.f32 %v2149, %v2161
  %v2164 = vadd.f32 %v2152, %v2161
  %v2165 = vadd.f32 %v2155, %v2161
  %v2166 = vadd.f32 %v2158, %v2161
  %v2167 = vsub.f32 0.0, %v2163
  %v2168 = vsub.f32 0.0, %v2164
  %v2169 = vsub.f32 0.0, %v2165
  %v2170 = vsub.f32 0.0, %v2166
  %v2171 = vmul.f32 %v2167, 1.442695
  %v2172 = vpow.pop %v2171
  %v2173 = vmul.f32 %v2168, 1.442695
  %v2174 = vpow.pop %v2173
  %v2175 = vmul.f32 %v2169, 1.442695
  %v2176 = vpow.pop %v2175
  %v2177 = vmul.f32 %v2170, 1.442695
  %v2178 = vpow.pop %v2177
  %v2179 = vadd.f32 %v2172, 1.0
  %v2180 = vadd.f32 %v2174, 1.0
  %v2181 = vadd.f32 %v2176, 1.0
  %v2182 = vadd.f32 %v2178, 1.0
  %v2183 = vrcp.pop %v2179
  %v2184 = vrcp.pop %v2180
  %v2185 = vrcp.pop %v2181
  %v2186 = vrcp.pop %v2182
  %2191 = vrot.lane.b32.xlu0 %v2183, 120
  %v2192 = vpop.permute.xlu0 %2191
  %2193 = vrot.lane.b32.xlu0 %v2184, 120
  %v2194 = vpop.permute.xlu0 %2193
  %2195 = vrot.lane.b32.xlu0 %v2185, 120
  %v2196 = vpop.permute.xlu0 %2195
  %2197 = vrot.lane.b32.xlu0 %v2186, 120
  %v2198 = vpop.permute.xlu0 %2197
  %v2203 = vadd.f32 %v2163, %v2192
  %v2204 = vadd.f32 %v2164, %v2194
  %v2205 = vadd.f32 %v2165, %v2196
  %v2206 = vadd.f32 %v2166, %v2198
  %2211 = vrot.lane.b32.xlu0 %v2163, 112
  %v2212 = vpop.permute.xlu0 %2211
  %2213 = vrot.lane.b32.xlu0 %v2164, 112
  %v2214 = vpop.permute.xlu0 %2213
  %2215 = vrot.lane.b32.xlu0 %v2165, 112
  %v2216 = vpop.permute.xlu0 %2215
  %2217 = vrot.lane.b32.xlu0 %v2166, 112
  %v2218 = vpop.permute.xlu0 %2217
  %v2223 = vadd.f32 %v2203, %v2212
  %v2224 = vadd.f32 %v2204, %v2214
  %v2225 = vadd.f32 %v2205, %v2216
  %v2226 = vadd.f32 %v2206, %v2218
  %v2227 = vmax.f32 %v2223, 0.0
  %v2228 = vmax.f32 %v2224, 0.0
  %v2229 = vmax.f32 %v2225, 0.0
  %v2230 = vmax.f32 %v2226, 0.0
  %v2232 = vperm.slane %v2076, 0
  %v2234 = vmul.f32 %v2227, %v2232
  %v2235 = vmul.f32 %v2228, %v2232
  %v2236 = vmul.f32 %v2229, %v2232
  %v2237 = vmul.f32 %v2230, %v2232
  %v2239 = vperm.slane %v2077, 0
  %v2241 = vadd.f32 %v2234, %v2239
  %v2242 = vadd.f32 %v2235, %v2239
  %v2243 = vadd.f32 %v2236, %v2239
  %v2244 = vadd.f32 %v2237, %v2239
  %v2245 = vadd.f32 %v2241, %v2069
  %v2246 = vadd.f32 %v2242, %v2070
  %v2247 = vadd.f32 %v2243, %v2071
  %v2248 = vadd.f32 %v2244, %v2072
  %2249 = vst.msk [vmem:[%s19] sm:$0xff] %vm1106, %v2245
  %2250 = vst.msk [vmem:[%s19 + $0x8] sm:$0xff] %vm1106, %v2246
  %2251 = vst.msk [vmem:[%s19 + $0x10] sm:$0xff] %vm1106, %v2247
  %2252 = vst.msk [vmem:[%s19 + $0x18] sm:$0xff] %vm1106, %v2248
  // Predicated region
  $region78: #{tpu_custom_call.1} parent=0 // pred_check
    _
  $region79: #{tpu_custom_call.1} parent=0 // pred_check_branch
    %2254 = sbr.rel (0) target = $region81
  $region80: #{tpu_custom_call.1} parent=0 // pred_region
    _
  $region81: #{tpu_custom_call.1} parent=0 // pred_fallthru
    _
  // Predicated region
  $region82: #{tpu_custom_call.1} parent=0 // pred_check
    _
  $region83: #{tpu_custom_call.1} parent=0 // pred_check_branch
    %2256 = sbr.rel (0) target = $region85
  $region84: #{tpu_custom_call.1} parent=0 // pred_region
    _
  $region85: #{tpu_custom_call.1} parent=0 // pred_fallthru
    _

</llo_original>
